<compile_context>
chip_gen: v7x
topology: tpu7x:2x2x1
jax: 0.10.0
libtpu: 0.0.40
codegen_flags: <defaults>
</compile_context>

<pallas_src>
import jax
import jax.numpy as jnp
from jax.experimental import pallas as pl
from jax.experimental.pallas import tpu as pltpu

IN_DIM = 512       # module input dim
HID = 512          # hidden dim
N_CLASSES = 10     # logits
OUT_PAD = 128      # lane-dense padded output width


def _round_up(x, m):
    return ((x + m - 1) // m) * m


def _mlp_kernel(h_ref, w1_ref, b1_ref, w2_ref, b2_ref, w3_ref, b3_ref, o_ref):
    # One batch tile per grid step. Dots run bf16 on the MXU and accumulate in
    # f32; bias-add + ReLU happen in f32, then recast to bf16 for the next dot.
    x = h_ref[...]                                                           # (TM, 512) bf16

    x = jnp.dot(x, w1_ref[...], preferred_element_type=jnp.float32) + b1_ref[...]
    x = jnp.maximum(x, 0.0).astype(jnp.bfloat16)

    x = jnp.dot(x, w2_ref[...], preferred_element_type=jnp.float32) + b2_ref[...]
    x = jnp.maximum(x, 0.0).astype(jnp.bfloat16)

    x = jnp.dot(x, w3_ref[...], preferred_element_type=jnp.float32) + b3_ref[...]
    o_ref[...] = x.astype(o_ref.dtype)                                       # (TM, 128) f32


def label_predictor(h, w1, b1, w2, b2, w3, b3, *, tm=256):
    """Forward pass of LabelPredictor.

    h : (B, 512) float32
    w1: (512, 512) bf16   b1: (1, 512) f32
    w2: (512, 512) bf16   b2: (1, 512) f32
    w3: (512, 10)  bf16   b3: (1, 10)  f32
    returns (B, 10) float32 logits
    """
    B = h.shape[0]

    # Lane-dense final projection: zero-pad the 10 output columns to 128.
    w3p = jnp.zeros((HID, OUT_PAD), w3.dtype).at[:, :N_CLASSES].set(w3)
    b3p = jnp.zeros((1, OUT_PAD), b3.dtype).at[:, :N_CLASSES].set(b3)

    # bf16 activations into the MXU (accumulation stays f32 in-kernel).
    h_bf = h.astype(jnp.bfloat16)

    # Batch tile: multiple of 16 (bf16 sublane packing); pad batch so the grid
    # divides evenly -> no masked partial tiles.
    TM = min(tm, _round_up(B, 16))
    Bp = _round_up(B, TM)
    if Bp != B:
        h_bf = jnp.pad(h_bf, ((0, Bp - B), (0, 0)))

    grid = (Bp // TM,)

    flops = 2 * Bp * (IN_DIM * HID + HID * HID + HID * OUT_PAD)
    bytes_accessed = (
        Bp * IN_DIM * 2                                      # h (bf16)
        + (IN_DIM * HID + HID * HID + HID * OUT_PAD) * 2     # weights (bf16)
        + (HID + HID + OUT_PAD) * 4                          # biases (f32)
        + Bp * OUT_PAD * 4                                   # output (f32)
    )

    out = pl.pallas_call(
        _mlp_kernel,
        out_shape=jax.ShapeDtypeStruct((Bp, OUT_PAD), jnp.float32),
        grid_spec=pltpu.PrefetchScalarGridSpec(
            num_scalar_prefetch=0,
            grid=grid,
            in_specs=[
                pl.BlockSpec((TM, IN_DIM), lambda i: (i, 0)),     # h tile (pipelined)
                pl.BlockSpec((IN_DIM, HID), lambda i: (0, 0)),    # w1 (resident)
                pl.BlockSpec((1, HID), lambda i: (0, 0)),         # b1
                pl.BlockSpec((HID, HID), lambda i: (0, 0)),       # w2
                pl.BlockSpec((1, HID), lambda i: (0, 0)),         # b2
                pl.BlockSpec((HID, OUT_PAD), lambda i: (0, 0)),   # w3 (padded)
                pl.BlockSpec((1, OUT_PAD), lambda i: (0, 0)),     # b3 (padded)
            ],
            out_specs=pl.BlockSpec((TM, OUT_PAD), lambda i: (i, 0)),
        ),
        compiler_params=pltpu.CompilerParams(
            dimension_semantics=("parallel",),
        ),
        cost_estimate=pl.CostEstimate(
            flops=flops, transcendentals=0, bytes_accessed=bytes_accessed),
    )(h_bf, w1, b1, w2, b2, w3p, b3p)

    # Drop batch padding and the 118 zero-weight/zero-bias padded classes.
    return out[:B, :N_CLASSES]


def init_params(key):
    """Deterministic synthetic parameters with PyTorch Linear shapes (out, in),
    returned transposed to (in, out). Weights bf16, biases f32."""
    dims = [(HID, IN_DIM), (HID, HID), (N_CLASSES, HID)]  # (out, in) per layer
    params = []
    for dout, din in dims:
        kw, kb, key = jax.random.split(key, 3)
        bound = 1.0 / jnp.sqrt(din)  # matches nn.Linear default init range
        w_pt = jax.random.uniform(kw, (dout, din), jnp.float32, -bound, bound)
        b_pt = jax.random.uniform(kb, (dout,), jnp.float32, -bound, bound)
        params.append((w_pt.T.astype(jnp.bfloat16), b_pt.reshape(1, dout)))
    (w1, b1), (w2, b2), (w3, b3) = params
    return w1, b1, w2, b2, w3, b3


def reference_forward(h, w1, b1, w2, b2, w3, b3):
    """Pure-JAX reference with the same bf16-operand / f32-accumulate math."""
    x = h.astype(jnp.bfloat16)
    x = jnp.dot(x, w1, preferred_element_type=jnp.float32) + b1
    x = jnp.maximum(x, 0.0).astype(jnp.bfloat16)
    x = jnp.dot(x, w2, preferred_element_type=jnp.float32) + b2
    x = jnp.maximum(x, 0.0).astype(jnp.bfloat16)
    x = jnp.dot(x, w3, preferred_element_type=jnp.float32) + b3
    return x


if __name__ == "__main__":
    key = jax.random.PRNGKey(0)
    k_h, k_p = jax.random.split(key)

    B = 8
    h = jax.random.normal(k_h, (B, IN_DIM), dtype=jnp.float32)
    w1, b1, w2, b2, w3, b3 = init_params(k_p)

    out = label_predictor(h, w1, b1, w2, b2, w3, b3)
    out = jax.block_until_ready(out)

    ref = reference_forward(h, w1, b1, w2, b2, w3, b3)
    assert out.shape == (B, N_CLASSES)
    assert jnp.allclose(out, ref, atol=1e-2, rtol=1e-2)

    print("KERNEL_OK")
</pallas_src>

<mosaic_0001>
module attributes {stable_mosaic.version = 11 : i64} {
  func.func @_mlp_kernel(%arg0: i32, %arg1: memref<16x512xbf16, #tpu.memory_space<vmem>>, %arg2: memref<512x512xbf16, #tpu.memory_space<vmem>>, %arg3: memref<1x512xf32, #tpu.memory_space<vmem>>, %arg4: memref<512x512xbf16, #tpu.memory_space<vmem>>, %arg5: memref<1x512xf32, #tpu.memory_space<vmem>>, %arg6: memref<512x128xbf16, #tpu.memory_space<vmem>>, %arg7: memref<1x128xf32, #tpu.memory_space<vmem>>, %arg8: memref<16x128xf32, #tpu.memory_space<vmem>>) attributes {dimension_semantics = [#tpu.dimension_semantics<parallel>], iteration_bounds = array<i64: 1>, scalar_prefetch = 0 : i64, scratch_operands = 0 : i64, tpu.core_type = #tpu.core_type<tc>, window_params = [{transform_indices = @transform_0, window_bounds = array<i64: 16, 512>}, {pipeline_mode = #tpu.pipeline_mode<synchronous>, transform_indices = @transform_1, window_bounds = array<i64: 512, 512>}, {pipeline_mode = #tpu.pipeline_mode<synchronous>, transform_indices = @transform_2, window_bounds = array<i64: 1, 512>}, {pipeline_mode = #tpu.pipeline_mode<synchronous>, transform_indices = @transform_3, window_bounds = array<i64: 512, 512>}, {pipeline_mode = #tpu.pipeline_mode<synchronous>, transform_indices = @transform_4, window_bounds = array<i64: 1, 512>}, {pipeline_mode = #tpu.pipeline_mode<synchronous>, transform_indices = @transform_5, window_bounds = array<i64: 512, 128>}, {pipeline_mode = #tpu.pipeline_mode<synchronous>, transform_indices = @transform_6, window_bounds = array<i64: 1, 128>}, {transform_indices = @transform_7, window_bounds = array<i64: 16, 128>}]} {
    %c0 = arith.constant 0 : index
    %c0_0 = arith.constant 0 : index
    %0 = vector.load %arg1[%c0, %c0_0] : memref<16x512xbf16, #tpu.memory_space<vmem>>, vector<16x512xbf16>
    %c0_1 = arith.constant 0 : index
    %c0_2 = arith.constant 0 : index
    %1 = vector.load %arg2[%c0_1, %c0_2] : memref<512x512xbf16, #tpu.memory_space<vmem>>, vector<512x512xbf16>
    %cst = arith.constant dense<0.000000e+00> : vector<16x512xf32>
    %2 = tpu.matmul %0, %1, %cst {dimension_numbers = #tpu.dot_dimension_numbers<[1], [0], [0], [1], [0, 0, 1, 1], [], []>} : vector<16x512xbf16>, vector<512x512xbf16>, vector<16x512xf32> -> vector<16x512xf32>
    %c0_3 = arith.constant 0 : index
    %c0_4 = arith.constant 0 : index
    %3 = vector.load %arg3[%c0_3, %c0_4] : memref<1x512xf32, #tpu.memory_space<vmem>>, vector<1x512xf32>
    %4 = vector.broadcast %3 : vector<1x512xf32> to vector<16x512xf32>
    %5 = arith.addf %2, %4 : vector<16x512xf32>
    %cst_5 = arith.constant 0.000000e+00 : f32
    %6 = vector.broadcast %cst_5 : f32 to vector<16x512xf32>
    %7 = arith.maximumf %5, %6 : vector<16x512xf32>
    %8 = arith.truncf %7 : vector<16x512xf32> to vector<16x512xbf16>
    %c0_6 = arith.constant 0 : index
    %c0_7 = arith.constant 0 : index
    %9 = vector.load %arg4[%c0_6, %c0_7] : memref<512x512xbf16, #tpu.memory_space<vmem>>, vector<512x512xbf16>
    %cst_8 = arith.constant dense<0.000000e+00> : vector<16x512xf32>
    %10 = tpu.matmul %8, %9, %cst_8 {dimension_numbers = #tpu.dot_dimension_numbers<[1], [0], [0], [1], [0, 0, 1, 1], [], []>} : vector<16x512xbf16>, vector<512x512xbf16>, vector<16x512xf32> -> vector<16x512xf32>
    %c0_9 = arith.constant 0 : index
    %c0_10 = arith.constant 0 : index
    %11 = vector.load %arg5[%c0_9, %c0_10] : memref<1x512xf32, #tpu.memory_space<vmem>>, vector<1x512xf32>
    %12 = vector.broadcast %11 : vector<1x512xf32> to vector<16x512xf32>
    %13 = arith.addf %10, %12 : vector<16x512xf32>
    %cst_11 = arith.constant 0.000000e+00 : f32
    %14 = vector.broadcast %cst_11 : f32 to vector<16x512xf32>
    %15 = arith.maximumf %13, %14 : vector<16x512xf32>
    %16 = arith.truncf %15 : vector<16x512xf32> to vector<16x512xbf16>
    %c0_12 = arith.constant 0 : index
    %c0_13 = arith.constant 0 : index
    %17 = vector.load %arg6[%c0_12, %c0_13] : memref<512x128xbf16, #tpu.memory_space<vmem>>, vector<512x128xbf16>
    %cst_14 = arith.constant dense<0.000000e+00> : vector<16x128xf32>
    %18 = tpu.matmul %16, %17, %cst_14 {dimension_numbers = #tpu.dot_dimension_numbers<[1], [0], [0], [1], [0, 0, 1, 1], [], []>} : vector<16x512xbf16>, vector<512x128xbf16>, vector<16x128xf32> -> vector<16x128xf32>
    %c0_15 = arith.constant 0 : index
    %c0_16 = arith.constant 0 : index
    %19 = vector.load %arg7[%c0_15, %c0_16] : memref<1x128xf32, #tpu.memory_space<vmem>>, vector<1x128xf32>
    %20 = vector.broadcast %19 : vector<1x128xf32> to vector<16x128xf32>
    %21 = arith.addf %18, %20 : vector<16x128xf32>
    %c0_17 = arith.constant 0 : index
    %c0_18 = arith.constant 0 : index
    %22 = vector.load %arg8[%c0_17, %c0_18] : memref<16x128xf32, #tpu.memory_space<vmem>>, vector<16x128xf32>
    tpu.vector_store %arg8[%c0_17, %c0_18], %21 {strides = array<i32>} : memref<16x128xf32, #tpu.memory_space<vmem>>, vector<16x128xf32>,
    return
  }
  func.func @transform_0(%arg0: i32) -> (i32, i32) {
    %c0_i32 = arith.constant 0 : i32
    %c0_i32_0 = arith.constant 0 : i32
    return %arg0, %c0_i32 : i32, i32
  }
  func.func @transform_1(%arg0: i32) -> (i32, i32) {
    %c0_i32 = arith.constant 0 : i32
    %c0_i32_0 = arith.constant 0 : i32
    %c0_i32_1 = arith.constant 0 : i32
    return %c0_i32, %c0_i32_0 : i32, i32
  }
  func.func @transform_2(%arg0: i32) -> (i32, i32) {
    %c0_i32 = arith.constant 0 : i32
    %c0_i32_0 = arith.constant 0 : i32
    %c0_i32_1 = arith.constant 0 : i32
    return %c0_i32, %c0_i32_0 : i32, i32
  }
  func.func @transform_3(%arg0: i32) -> (i32, i32) {
    %c0_i32 = arith.constant 0 : i32
    %c0_i32_0 = arith.constant 0 : i32
    %c0_i32_1 = arith.constant 0 : i32
    return %c0_i32, %c0_i32_0 : i32, i32
  }
  func.func @transform_4(%arg0: i32) -> (i32, i32) {
    %c0_i32 = arith.constant 0 : i32
    %c0_i32_0 = arith.constant 0 : i32
    %c0_i32_1 = arith.constant 0 : i32
    return %c0_i32, %c0_i32_0 : i32, i32
  }
  func.func @transform_5(%arg0: i32) -> (i32, i32) {
    %c0_i32 = arith.constant 0 : i32
    %c0_i32_0 = arith.constant 0 : i32
    %c0_i32_1 = arith.constant 0 : i32
    return %c0_i32, %c0_i32_0 : i32, i32
  }
  func.func @transform_6(%arg0: i32) -> (i32, i32) {
    %c0_i32 = arith.constant 0 : i32
    %c0_i32_0 = arith.constant 0 : i32
    %c0_i32_1 = arith.constant 0 : i32
    return %c0_i32, %c0_i32_0 : i32, i32
  }
  func.func @transform_7(%arg0: i32) -> (i32, i32) {
    %c0_i32 = arith.constant 0 : i32
    %c0_i32_0 = arith.constant 0 : i32
    return %arg0, %c0_i32 : i32, i32
  }
}

</mosaic_0001>

<llo_original>
// kernel: tpu_custom_call.1
$region0: #{tpu_custom_call.1}
  #allocation0 [shape = 'u32[]', space=smem, size = 0x4, offset = 0x4, fixed_abs, tag = 'smem constant byte address 0x4 - core index']
  #allocation1 [shape = 'u32[144,128]{1,0:T(1,128)}', space=vmem, size = 0x12000, scoped, tag = 'internal scratch']
  %s0 = inlined_call_operand.hbm [shape: bf16[16,512], index: 0, kind: input, shape index: {}]
  %s1 = inlined_call_operand.hbm [shape: bf16[512,512], index: 1, kind: input, shape index: {}]
  %s2 = inlined_call_operand.vmem [shape: f32[1,512], index: 2, kind: input, shape index: {}]
  %s3 = inlined_call_operand.hbm [shape: bf16[512,512], index: 3, kind: input, shape index: {}]
  %s4 = inlined_call_operand.vmem [shape: f32[1,512], index: 4, kind: input, shape index: {}]
  %s5 = inlined_call_operand.hbm [shape: bf16[512,128], index: 5, kind: input, shape index: {}]
  %s6 = inlined_call_operand.vmem [shape: f32[1,128], index: 6, kind: input, shape index: {}]
  %s7 = inlined_call_operand.hbm [shape: f32[16,128], index: 7, kind: output, shape index: {}]
  %s8 = sld [smem:[#allocation0]]
  $region54: #{tpu_custom_call.1} parent=0
    _
  %s10 = ssub.s32 1, %s8
  %s11 = scalar_select 0, %s10, %s8
  $region1: #{tpu_custom_call.1} parent=0
    #allocation2 [shape = 'u8[16384]{0}', space=vmem, size = 0x4000, scoped, tag = 'input window, operand 0, single buffered']
    #allocation3 [shape = 's32[1]{0}', space=sflag, size = 0x4, scoped, tag = 'scoped memory for tpu_custom_call.1']
    #allocation4 [shape = 's32[1]{0}', space=sflag, size = 0x4, scoped, tag = 'scoped memory for tpu_custom_call.1']
    #allocation5 [shape = 'u8[524288]{0}', space=vmem, size = 0x80000, scoped, tag = 'input window, operand 1, single buffered']
    #allocation6 [shape = 's32[1]{0}', space=sflag, size = 0x4, scoped, tag = 'scoped memory for tpu_custom_call.1']
    #allocation7 [shape = 'u8[524288]{0}', space=vmem, size = 0x80000, scoped, tag = 'input window, operand 3, single buffered']
    #allocation8 [shape = 'u8[131072]{0}', space=vmem, size = 0x20000, scoped, tag = 'input window, operand 5, single buffered']
    #allocation9 [shape = 's32[1]{0}', space=sflag, size = 0x4, scoped, tag = 'scoped memory for tpu_custom_call.1']
    #allocation10 [shape = 'u8[8192]{0}', space=vmem, size = 0x2000, scoped, tag = 'output window, operand 0, single buffered']
    %12 = vsyncpa [#allocation3], 0
    %13 = vsyncpa [#allocation6], 0
    %14 = vsyncpa [#allocation9], 0
    %15 = vsyncpa [#allocation4], 0
    // Predicated region
    $region2: #{tpu_custom_call.1} parent=1 // pred_check
      _
    $region3: #{tpu_custom_call.1} parent=1 // pred_check_branch
      %17 = sbr.rel (0) target = $region5
    $region4: #{tpu_custom_call.1} parent=1 // pred_region
      %s19 = ssub.s32 512, 512
      %20 = vsyncadd [#allocation3], %s19
      %s21 = sshll.u32 [#allocation2], 4
      %s22 = int_to_ptr.vmem [resolvable:$true] %s21
      %27 = dma.hbm_to_vmem [thread:$0]  %s0, 512, %s22, [#allocation3], 256, 256, 16
    $region5: #{tpu_custom_call.1} parent=1 // pred_fallthru
      _
    // Predicated region
    $region6: #{tpu_custom_call.1} parent=1 // pred_check
      _
    $region7: #{tpu_custom_call.1} parent=1 // pred_check_branch
      %29 = sbr.rel (0) target = $region9
    $region8: #{tpu_custom_call.1} parent=1 // pred_region
      %s31 = ssub.s32 16384, 16384
      %32 = vsyncadd [#allocation6], %s31
      %s33 = sshll.u32 [#allocation5], 4
      %s34 = int_to_ptr.vmem [resolvable:$true] %s33
      %39 = dma.hbm_to_vmem [thread:$0]  %s1, 16384, %s34, [#allocation6], 256, 256, 16
    $region9: #{tpu_custom_call.1} parent=1 // pred_fallthru
      _
    // Predicated region
    $region10: #{tpu_custom_call.1} parent=1 // pred_check
      _
    $region11: #{tpu_custom_call.1} parent=1 // pred_check_branch
      %41 = sbr.rel (0) target = $region13
    $region12: #{tpu_custom_call.1} parent=1 // pred_region
      _
    $region13: #{tpu_custom_call.1} parent=1 // pred_fallthru
      _
    // Predicated region
    $region14: #{tpu_custom_call.1} parent=1 // pred_check
      _
    $region15: #{tpu_custom_call.1} parent=1 // pred_check_branch
      %43 = sbr.rel (0) target = $region17
    $region16: #{tpu_custom_call.1} parent=1 // pred_region
      %s45 = ssub.s32 16384, 16384
      %46 = vsyncadd [#allocation6], %s45
      %s47 = sshll.u32 [#allocation7], 4
      %s48 = int_to_ptr.vmem [resolvable:$true] %s47
      %53 = dma.hbm_to_vmem [thread:$0]  %s3, 16384, %s48, [#allocation6], 256, 256, 16
    $region17: #{tpu_custom_call.1} parent=1 // pred_fallthru
      _
    // Predicated region
    $region18: #{tpu_custom_call.1} parent=1 // pred_check
      _
    $region19: #{tpu_custom_call.1} parent=1 // pred_check_branch
      %55 = sbr.rel (0) target = $region21
    $region20: #{tpu_custom_call.1} parent=1 // pred_region
      _
    $region21: #{tpu_custom_call.1} parent=1 // pred_fallthru
      _
    // Predicated region
    $region22: #{tpu_custom_call.1} parent=1 // pred_check
      _
    $region23: #{tpu_custom_call.1} parent=1 // pred_check_branch
      %57 = sbr.rel (0) target = $region25
    $region24: #{tpu_custom_call.1} parent=1 // pred_region
      %s59 = ssub.s32 4096, 4096
      %60 = vsyncadd [#allocation9], %s59
      %s61 = sshll.u32 [#allocation8], 4
      %s62 = int_to_ptr.vmem [resolvable:$true] %s61
      %67 = dma.hbm_to_vmem [thread:$0]  %s5, 4096, %s62, [#allocation9], 64, 64, 4
    $region25: #{tpu_custom_call.1} parent=1 // pred_fallthru
      _
    // Predicated region
    $region26: #{tpu_custom_call.1} parent=1 // pred_check
      _
    $region27: #{tpu_custom_call.1} parent=1 // pred_check_branch
      %69 = sbr.rel (0) target = $region29
    $region28: #{tpu_custom_call.1} parent=1 // pred_region
      _
    $region29: #{tpu_custom_call.1} parent=1 // pred_fallthru
      _
    // Predicated region
    $region30: #{tpu_custom_call.1} parent=1 // pred_check
      _
    $region31: #{tpu_custom_call.1} parent=1 // pred_check_branch
      %71 = sbr.rel (0) target = $region33
    $region32: #{tpu_custom_call.1} parent=1 // pred_region
      %72 = dma.done [#allocation3], 512
    $region33: #{tpu_custom_call.1} parent=1 // pred_fallthru
      _
    // Predicated region
    $region34: #{tpu_custom_call.1} parent=1 // pred_check
      _
    $region35: #{tpu_custom_call.1} parent=1 // pred_check_branch
      %74 = sbr.rel (0) target = $region37
    $region36: #{tpu_custom_call.1} parent=1 // pred_region
      %75 = dma.done [#allocation6], 16384
    $region37: #{tpu_custom_call.1} parent=1 // pred_fallthru
      _
    // Predicated region
    $region38: #{tpu_custom_call.1} parent=1 // pred_check
      _
    $region39: #{tpu_custom_call.1} parent=1 // pred_check_branch
      %77 = sbr.rel (0) target = $region41
    $region40: #{tpu_custom_call.1} parent=1 // pred_region
      %78 = dma.done [#allocation6], 16384
    $region41: #{tpu_custom_call.1} parent=1 // pred_fallthru
      _
    // Predicated region
    $region42: #{tpu_custom_call.1} parent=1 // pred_check
      _
    $region43: #{tpu_custom_call.1} parent=1 // pred_check_branch
      %80 = sbr.rel (0) target = $region45
    $region44: #{tpu_custom_call.1} parent=1 // pred_region
      %81 = dma.done [#allocation9], 4096
    $region45: #{tpu_custom_call.1} parent=1 // pred_fallthru
      _
    %v83 = vld [vmem:[#allocation2] sm:$0xff]
    %v84 = vld [vmem:[#allocation2 + $0x8] sm:$0xff]
    %v85 = vld [vmem:[#allocation2 + $0x10] sm:$0xff]
    %v86 = vld [vmem:[#allocation2 + $0x18] sm:$0xff]
    %v87 = vld [vmem:[#allocation5] sm:$0xff]
    %v88 = vld [vmem:[#allocation5 + $0x8] sm:$0xff]
    %v89 = vld [vmem:[#allocation5 + $0x10] sm:$0xff]
    %v90 = vld [vmem:[#allocation5 + $0x18] sm:$0xff]
    %v91 = vld [vmem:[#allocation5 + $0x20] sm:$0xff]
    %v92 = vld [vmem:[#allocation5 + $0x28] sm:$0xff]
    %v93 = vld [vmem:[#allocation5 + $0x30] sm:$0xff]
    %v94 = vld [vmem:[#allocation5 + $0x38] sm:$0xff]
    %v95 = vld [vmem:[#allocation5 + $0x40] sm:$0xff]
    %v96 = vld [vmem:[#allocation5 + $0x48] sm:$0xff]
    %v97 = vld [vmem:[#allocation5 + $0x50] sm:$0xff]
    %v98 = vld [vmem:[#allocation5 + $0x58] sm:$0xff]
    %v99 = vld [vmem:[#allocation5 + $0x60] sm:$0xff]
    %v100 = vld [vmem:[#allocation5 + $0x68] sm:$0xff]
    %v101 = vld [vmem:[#allocation5 + $0x70] sm:$0xff]
    %v102 = vld [vmem:[#allocation5 + $0x78] sm:$0xff]
    %v103 = vld [vmem:[#allocation5 + $0x80] sm:$0xff]
    %v104 = vld [vmem:[#allocation5 + $0x88] sm:$0xff]
    %v105 = vld [vmem:[#allocation5 + $0x90] sm:$0xff]
    %v106 = vld [vmem:[#allocation5 + $0x98] sm:$0xff]
    %v107 = vld [vmem:[#allocation5 + $0xa0] sm:$0xff]
    %v108 = vld [vmem:[#allocation5 + $0xa8] sm:$0xff]
    %v109 = vld [vmem:[#allocation5 + $0xb0] sm:$0xff]
    %v110 = vld [vmem:[#allocation5 + $0xb8] sm:$0xff]
    %v111 = vld [vmem:[#allocation5 + $0xc0] sm:$0xff]
    %v112 = vld [vmem:[#allocation5 + $0xc8] sm:$0xff]
    %v113 = vld [vmem:[#allocation5 + $0xd0] sm:$0xff]
    %v114 = vld [vmem:[#allocation5 + $0xd8] sm:$0xff]
    %v115 = vld [vmem:[#allocation5 + $0xe0] sm:$0xff]
    %v116 = vld [vmem:[#allocation5 + $0xe8] sm:$0xff]
    %v117 = vld [vmem:[#allocation5 + $0xf0] sm:$0xff]
    %v118 = vld [vmem:[#allocation5 + $0xf8] sm:$0xff]
    %v119 = vld [vmem:[#allocation5 + $0x100] sm:$0xff]
    %v120 = vld [vmem:[#allocation5 + $0x108] sm:$0xff]
    %v121 = vld [vmem:[#allocation5 + $0x110] sm:$0xff]
    %v122 = vld [vmem:[#allocation5 + $0x118] sm:$0xff]
    %v123 = vld [vmem:[#allocation5 + $0x120] sm:$0xff]
    %v124 = vld [vmem:[#allocation5 + $0x128] sm:$0xff]
    %v125 = vld [vmem:[#allocation5 + $0x130] sm:$0xff]
    %v126 = vld [vmem:[#allocation5 + $0x138] sm:$0xff]
    %v127 = vld [vmem:[#allocation5 + $0x140] sm:$0xff]
    %v128 = vld [vmem:[#allocation5 + $0x148] sm:$0xff]
    %v129 = vld [vmem:[#allocation5 + $0x150] sm:$0xff]
    %v130 = vld [vmem:[#allocation5 + $0x158] sm:$0xff]
    %v131 = vld [vmem:[#allocation5 + $0x160] sm:$0xff]
    %v132 = vld [vmem:[#allocation5 + $0x168] sm:$0xff]
    %v133 = vld [vmem:[#allocation5 + $0x170] sm:$0xff]
    %v134 = vld [vmem:[#allocation5 + $0x178] sm:$0xff]
    %v135 = vld [vmem:[#allocation5 + $0x180] sm:$0xff]
    %v136 = vld [vmem:[#allocation5 + $0x188] sm:$0xff]
    %v137 = vld [vmem:[#allocation5 + $0x190] sm:$0xff]
    %v138 = vld [vmem:[#allocation5 + $0x198] sm:$0xff]
    %v139 = vld [vmem:[#allocation5 + $0x1a0] sm:$0xff]
    %v140 = vld [vmem:[#allocation5 + $0x1a8] sm:$0xff]
    %v141 = vld [vmem:[#allocation5 + $0x1b0] sm:$0xff]
    %v142 = vld [vmem:[#allocation5 + $0x1b8] sm:$0xff]
    %v143 = vld [vmem:[#allocation5 + $0x1c0] sm:$0xff]
    %v144 = vld [vmem:[#allocation5 + $0x1c8] sm:$0xff]
    %v145 = vld [vmem:[#allocation5 + $0x1d0] sm:$0xff]
    %v146 = vld [vmem:[#allocation5 + $0x1d8] sm:$0xff]
    %v147 = vld [vmem:[#allocation5 + $0x1e0] sm:$0xff]
    %v148 = vld [vmem:[#allocation5 + $0x1e8] sm:$0xff]
    %v149 = vld [vmem:[#allocation5 + $0x1f0] sm:$0xff]
    %v150 = vld [vmem:[#allocation5 + $0x1f8] sm:$0xff]
    %v151 = vld [vmem:[#allocation5 + $0x200] sm:$0xff]
    %v152 = vld [vmem:[#allocation5 + $0x208] sm:$0xff]
    %v153 = vld [vmem:[#allocation5 + $0x210] sm:$0xff]
    %v154 = vld [vmem:[#allocation5 + $0x218] sm:$0xff]
    %v155 = vld [vmem:[#allocation5 + $0x220] sm:$0xff]
    %v156 = vld [vmem:[#allocation5 + $0x228] sm:$0xff]
    %v157 = vld [vmem:[#allocation5 + $0x230] sm:$0xff]
    %v158 = vld [vmem:[#allocation5 + $0x238] sm:$0xff]
    %v159 = vld [vmem:[#allocation5 + $0x240] sm:$0xff]
    %v160 = vld [vmem:[#allocation5 + $0x248] sm:$0xff]
    %v161 = vld [vmem:[#allocation5 + $0x250] sm:$0xff]
    %v162 = vld [vmem:[#allocation5 + $0x258] sm:$0xff]
    %v163 = vld [vmem:[#allocation5 + $0x260] sm:$0xff]
    %v164 = vld [vmem:[#allocation5 + $0x268] sm:$0xff]
    %v165 = vld [vmem:[#allocation5 + $0x270] sm:$0xff]
    %v166 = vld [vmem:[#allocation5 + $0x278] sm:$0xff]
    %v167 = vld [vmem:[#allocation5 + $0x280] sm:$0xff]
    %v168 = vld [vmem:[#allocation5 + $0x288] sm:$0xff]
    %v169 = vld [vmem:[#allocation5 + $0x290] sm:$0xff]
    %v170 = vld [vmem:[#allocation5 + $0x298] sm:$0xff]
    %v171 = vld [vmem:[#allocation5 + $0x2a0] sm:$0xff]
    %v172 = vld [vmem:[#allocation5 + $0x2a8] sm:$0xff]
    %v173 = vld [vmem:[#allocation5 + $0x2b0] sm:$0xff]
    %v174 = vld [vmem:[#allocation5 + $0x2b8] sm:$0xff]
    %v175 = vld [vmem:[#allocation5 + $0x2c0] sm:$0xff]
    %v176 = vld [vmem:[#allocation5 + $0x2c8] sm:$0xff]
    %v177 = vld [vmem:[#allocation5 + $0x2d0] sm:$0xff]
    %v178 = vld [vmem:[#allocation5 + $0x2d8] sm:$0xff]
    %v179 = vld [vmem:[#allocation5 + $0x2e0] sm:$0xff]
    %v180 = vld [vmem:[#allocation5 + $0x2e8] sm:$0xff]
    %v181 = vld [vmem:[#allocation5 + $0x2f0] sm:$0xff]
    %v182 = vld [vmem:[#allocation5 + $0x2f8] sm:$0xff]
    %v183 = vld [vmem:[#allocation5 + $0x300] sm:$0xff]
    %v184 = vld [vmem:[#allocation5 + $0x308] sm:$0xff]
    %v185 = vld [vmem:[#allocation5 + $0x310] sm:$0xff]
    %v186 = vld [vmem:[#allocation5 + $0x318] sm:$0xff]
    %v187 = vld [vmem:[#allocation5 + $0x320] sm:$0xff]
    %v188 = vld [vmem:[#allocation5 + $0x328] sm:$0xff]
    %v189 = vld [vmem:[#allocation5 + $0x330] sm:$0xff]
    %v190 = vld [vmem:[#allocation5 + $0x338] sm:$0xff]
    %v191 = vld [vmem:[#allocation5 + $0x340] sm:$0xff]
    %v192 = vld [vmem:[#allocation5 + $0x348] sm:$0xff]
    %v193 = vld [vmem:[#allocation5 + $0x350] sm:$0xff]
    %v194 = vld [vmem:[#allocation5 + $0x358] sm:$0xff]
    %v195 = vld [vmem:[#allocation5 + $0x360] sm:$0xff]
    %v196 = vld [vmem:[#allocation5 + $0x368] sm:$0xff]
    %v197 = vld [vmem:[#allocation5 + $0x370] sm:$0xff]
    %v198 = vld [vmem:[#allocation5 + $0x378] sm:$0xff]
    %v199 = vld [vmem:[#allocation5 + $0x380] sm:$0xff]
    %v200 = vld [vmem:[#allocation5 + $0x388] sm:$0xff]
    %v201 = vld [vmem:[#allocation5 + $0x390] sm:$0xff]
    %v202 = vld [vmem:[#allocation5 + $0x398] sm:$0xff]
    %v203 = vld [vmem:[#allocation5 + $0x3a0] sm:$0xff]
    %v204 = vld [vmem:[#allocation5 + $0x3a8] sm:$0xff]
    %v205 = vld [vmem:[#allocation5 + $0x3b0] sm:$0xff]
    %v206 = vld [vmem:[#allocation5 + $0x3b8] sm:$0xff]
    %v207 = vld [vmem:[#allocation5 + $0x3c0] sm:$0xff]
    %v208 = vld [vmem:[#allocation5 + $0x3c8] sm:$0xff]
    %v209 = vld [vmem:[#allocation5 + $0x3d0] sm:$0xff]
    %v210 = vld [vmem:[#allocation5 + $0x3d8] sm:$0xff]
    %v211 = vld [vmem:[#allocation5 + $0x3e0] sm:$0xff]
    %v212 = vld [vmem:[#allocation5 + $0x3e8] sm:$0xff]
    %v213 = vld [vmem:[#allocation5 + $0x3f0] sm:$0xff]
    %v214 = vld [vmem:[#allocation5 + $0x3f8] sm:$0xff]
    %v215 = vld [vmem:[%s2] sm:$0xf]
    %v217 = vlaneseq
    %v218 = vshrl.u32 %v217, 7
    %v219 = vsub.s32 0, %v218
    %v220 = vrot.slane %v215, %v219
    %v221 = vlaneseq
    %v222 = vshrl.u32 %v221, 7
    %v223 = vsub.s32 1, %v222
    %v224 = vrot.slane %v215, %v223
    %v225 = vlaneseq
    %v226 = vshrl.u32 %v225, 7
    %v227 = vsub.s32 2, %v226
    %v228 = vrot.slane %v215, %v227
    %v229 = vlaneseq
    %v230 = vshrl.u32 %v229, 7
    %v231 = vsub.s32 3, %v230
    %v232 = vrot.slane %v215, %v231
    %v241 = vunpack.c.l.b16 %v83
    %v242 = vunpack.c.h.b16 %v83
    %v243 = vunpack.c.l.b16 %v84
    %v244 = vunpack.c.h.b16 %v84
    %v245 = vunpack.c.l.b16 %v85
    %v246 = vunpack.c.h.b16 %v85
    %v247 = vunpack.c.l.b16 %v86
    %v248 = vunpack.c.h.b16 %v86
    %v249 = vpack.c.b16 %v245, %v241
    %v250 = vpack.c.b16 %v246, %v242
    %v251 = vpack.c.b16 %v247, %v243
    %v252 = vpack.c.b16 %v248, %v244
    %v385 = vunpack.c.l.b16 %v87
    %v386 = vunpack.c.h.b16 %v87
    %v387 = vunpack.c.l.b16 %v88
    %v388 = vunpack.c.h.b16 %v88
    %v389 = vunpack.c.l.b16 %v89
    %v390 = vunpack.c.h.b16 %v89
    %v391 = vunpack.c.l.b16 %v90
    %v392 = vunpack.c.h.b16 %v90
    %v393 = vunpack.c.l.b16 %v91
    %v394 = vunpack.c.h.b16 %v91
    %v395 = vunpack.c.l.b16 %v92
    %v396 = vunpack.c.h.b16 %v92
    %v397 = vunpack.c.l.b16 %v93
    %v398 = vunpack.c.h.b16 %v93
    %v399 = vunpack.c.l.b16 %v94
    %v400 = vunpack.c.h.b16 %v94
    %v401 = vunpack.c.l.b16 %v95
    %v402 = vunpack.c.h.b16 %v95
    %v403 = vunpack.c.l.b16 %v96
    %v404 = vunpack.c.h.b16 %v96
    %v405 = vunpack.c.l.b16 %v97
    %v406 = vunpack.c.h.b16 %v97
    %v407 = vunpack.c.l.b16 %v98
    %v408 = vunpack.c.h.b16 %v98
    %v409 = vunpack.c.l.b16 %v99
    %v410 = vunpack.c.h.b16 %v99
    %v411 = vunpack.c.l.b16 %v100
    %v412 = vunpack.c.h.b16 %v100
    %v413 = vunpack.c.l.b16 %v101
    %v414 = vunpack.c.h.b16 %v101
    %v415 = vunpack.c.l.b16 %v102
    %v416 = vunpack.c.h.b16 %v102
    %v417 = vunpack.c.l.b16 %v103
    %v418 = vunpack.c.h.b16 %v103
    %v419 = vunpack.c.l.b16 %v104
    %v420 = vunpack.c.h.b16 %v104
    %v421 = vunpack.c.l.b16 %v105
    %v422 = vunpack.c.h.b16 %v105
    %v423 = vunpack.c.l.b16 %v106
    %v424 = vunpack.c.h.b16 %v106
    %v425 = vunpack.c.l.b16 %v107
    %v426 = vunpack.c.h.b16 %v107
    %v427 = vunpack.c.l.b16 %v108
    %v428 = vunpack.c.h.b16 %v108
    %v429 = vunpack.c.l.b16 %v109
    %v430 = vunpack.c.h.b16 %v109
    %v431 = vunpack.c.l.b16 %v110
    %v432 = vunpack.c.h.b16 %v110
    %v433 = vunpack.c.l.b16 %v111
    %v434 = vunpack.c.h.b16 %v111
    %v435 = vunpack.c.l.b16 %v112
    %v436 = vunpack.c.h.b16 %v112
    %v437 = vunpack.c.l.b16 %v113
    %v438 = vunpack.c.h.b16 %v113
    %v439 = vunpack.c.l.b16 %v114
    %v440 = vunpack.c.h.b16 %v114
    %v441 = vunpack.c.l.b16 %v115
    %v442 = vunpack.c.h.b16 %v115
    %v443 = vunpack.c.l.b16 %v116
    %v444 = vunpack.c.h.b16 %v116
    %v445 = vunpack.c.l.b16 %v117
    %v446 = vunpack.c.h.b16 %v117
    %v447 = vunpack.c.l.b16 %v118
    %v448 = vunpack.c.h.b16 %v118
    %v449 = vunpack.c.l.b16 %v119
    %v450 = vunpack.c.h.b16 %v119
    %v451 = vunpack.c.l.b16 %v120
    %v452 = vunpack.c.h.b16 %v120
    %v453 = vunpack.c.l.b16 %v121
    %v454 = vunpack.c.h.b16 %v121
    %v455 = vunpack.c.l.b16 %v122
    %v456 = vunpack.c.h.b16 %v122
    %v457 = vunpack.c.l.b16 %v123
    %v458 = vunpack.c.h.b16 %v123
    %v459 = vunpack.c.l.b16 %v124
    %v460 = vunpack.c.h.b16 %v124
    %v461 = vunpack.c.l.b16 %v125
    %v462 = vunpack.c.h.b16 %v125
    %v463 = vunpack.c.l.b16 %v126
    %v464 = vunpack.c.h.b16 %v126
    %v465 = vunpack.c.l.b16 %v127
    %v466 = vunpack.c.h.b16 %v127
    %v467 = vunpack.c.l.b16 %v128
    %v468 = vunpack.c.h.b16 %v128
    %v469 = vunpack.c.l.b16 %v129
    %v470 = vunpack.c.h.b16 %v129
    %v471 = vunpack.c.l.b16 %v130
    %v472 = vunpack.c.h.b16 %v130
    %v473 = vunpack.c.l.b16 %v131
    %v474 = vunpack.c.h.b16 %v131
    %v475 = vunpack.c.l.b16 %v132
    %v476 = vunpack.c.h.b16 %v132
    %v477 = vunpack.c.l.b16 %v133
    %v478 = vunpack.c.h.b16 %v133
    %v479 = vunpack.c.l.b16 %v134
    %v480 = vunpack.c.h.b16 %v134
    %v481 = vunpack.c.l.b16 %v135
    %v482 = vunpack.c.h.b16 %v135
    %v483 = vunpack.c.l.b16 %v136
    %v484 = vunpack.c.h.b16 %v136
    %v485 = vunpack.c.l.b16 %v137
    %v486 = vunpack.c.h.b16 %v137
    %v487 = vunpack.c.l.b16 %v138
    %v488 = vunpack.c.h.b16 %v138
    %v489 = vunpack.c.l.b16 %v139
    %v490 = vunpack.c.h.b16 %v139
    %v491 = vunpack.c.l.b16 %v140
    %v492 = vunpack.c.h.b16 %v140
    %v493 = vunpack.c.l.b16 %v141
    %v494 = vunpack.c.h.b16 %v141
    %v495 = vunpack.c.l.b16 %v142
    %v496 = vunpack.c.h.b16 %v142
    %v497 = vunpack.c.l.b16 %v143
    %v498 = vunpack.c.h.b16 %v143
    %v499 = vunpack.c.l.b16 %v144
    %v500 = vunpack.c.h.b16 %v144
    %v501 = vunpack.c.l.b16 %v145
    %v502 = vunpack.c.h.b16 %v145
    %v503 = vunpack.c.l.b16 %v146
    %v504 = vunpack.c.h.b16 %v146
    %v505 = vunpack.c.l.b16 %v147
    %v506 = vunpack.c.h.b16 %v147
    %v507 = vunpack.c.l.b16 %v148
    %v508 = vunpack.c.h.b16 %v148
    %v509 = vunpack.c.l.b16 %v149
    %v510 = vunpack.c.h.b16 %v149
    %v511 = vunpack.c.l.b16 %v150
    %v512 = vunpack.c.h.b16 %v150
    %v513 = vunpack.c.l.b16 %v151
    %v514 = vunpack.c.h.b16 %v151
    %v515 = vunpack.c.l.b16 %v152
    %v516 = vunpack.c.h.b16 %v152
    %v517 = vunpack.c.l.b16 %v153
    %v518 = vunpack.c.h.b16 %v153
    %v519 = vunpack.c.l.b16 %v154
    %v520 = vunpack.c.h.b16 %v154
    %v521 = vunpack.c.l.b16 %v155
    %v522 = vunpack.c.h.b16 %v155
    %v523 = vunpack.c.l.b16 %v156
    %v524 = vunpack.c.h.b16 %v156
    %v525 = vunpack.c.l.b16 %v157
    %v526 = vunpack.c.h.b16 %v157
    %v527 = vunpack.c.l.b16 %v158
    %v528 = vunpack.c.h.b16 %v158
    %v529 = vunpack.c.l.b16 %v159
    %v530 = vunpack.c.h.b16 %v159
    %v531 = vunpack.c.l.b16 %v160
    %v532 = vunpack.c.h.b16 %v160
    %v533 = vunpack.c.l.b16 %v161
    %v534 = vunpack.c.h.b16 %v161
    %v535 = vunpack.c.l.b16 %v162
    %v536 = vunpack.c.h.b16 %v162
    %v537 = vunpack.c.l.b16 %v163
    %v538 = vunpack.c.h.b16 %v163
    %v539 = vunpack.c.l.b16 %v164
    %v540 = vunpack.c.h.b16 %v164
    %v541 = vunpack.c.l.b16 %v165
    %v542 = vunpack.c.h.b16 %v165
    %v543 = vunpack.c.l.b16 %v166
    %v544 = vunpack.c.h.b16 %v166
    %v545 = vunpack.c.l.b16 %v167
    %v546 = vunpack.c.h.b16 %v167
    %v547 = vunpack.c.l.b16 %v168
    %v548 = vunpack.c.h.b16 %v168
    %v549 = vunpack.c.l.b16 %v169
    %v550 = vunpack.c.h.b16 %v169
    %v551 = vunpack.c.l.b16 %v170
    %v552 = vunpack.c.h.b16 %v170
    %v553 = vunpack.c.l.b16 %v171
    %v554 = vunpack.c.h.b16 %v171
    %v555 = vunpack.c.l.b16 %v172
    %v556 = vunpack.c.h.b16 %v172
    %v557 = vunpack.c.l.b16 %v173
    %v558 = vunpack.c.h.b16 %v173
    %v559 = vunpack.c.l.b16 %v174
    %v560 = vunpack.c.h.b16 %v174
    %v561 = vunpack.c.l.b16 %v175
    %v562 = vunpack.c.h.b16 %v175
    %v563 = vunpack.c.l.b16 %v176
    %v564 = vunpack.c.h.b16 %v176
    %v565 = vunpack.c.l.b16 %v177
    %v566 = vunpack.c.h.b16 %v177
    %v567 = vunpack.c.l.b16 %v178
    %v568 = vunpack.c.h.b16 %v178
    %v569 = vunpack.c.l.b16 %v179
    %v570 = vunpack.c.h.b16 %v179
    %v571 = vunpack.c.l.b16 %v180
    %v572 = vunpack.c.h.b16 %v180
    %v573 = vunpack.c.l.b16 %v181
    %v574 = vunpack.c.h.b16 %v181
    %v575 = vunpack.c.l.b16 %v182
    %v576 = vunpack.c.h.b16 %v182
    %v577 = vunpack.c.l.b16 %v183
    %v578 = vunpack.c.h.b16 %v183
    %v579 = vunpack.c.l.b16 %v184
    %v580 = vunpack.c.h.b16 %v184
    %v581 = vunpack.c.l.b16 %v185
    %v582 = vunpack.c.h.b16 %v185
    %v583 = vunpack.c.l.b16 %v186
    %v584 = vunpack.c.h.b16 %v186
    %v585 = vunpack.c.l.b16 %v187
    %v586 = vunpack.c.h.b16 %v187
    %v587 = vunpack.c.l.b16 %v188
    %v588 = vunpack.c.h.b16 %v188
    %v589 = vunpack.c.l.b16 %v189
    %v590 = vunpack.c.h.b16 %v189
    %v591 = vunpack.c.l.b16 %v190
    %v592 = vunpack.c.h.b16 %v190
    %v593 = vunpack.c.l.b16 %v191
    %v594 = vunpack.c.h.b16 %v191
    %v595 = vunpack.c.l.b16 %v192
    %v596 = vunpack.c.h.b16 %v192
    %v597 = vunpack.c.l.b16 %v193
    %v598 = vunpack.c.h.b16 %v193
    %v599 = vunpack.c.l.b16 %v194
    %v600 = vunpack.c.h.b16 %v194
    %v601 = vunpack.c.l.b16 %v195
    %v602 = vunpack.c.h.b16 %v195
    %v603 = vunpack.c.l.b16 %v196
    %v604 = vunpack.c.h.b16 %v196
    %v605 = vunpack.c.l.b16 %v197
    %v606 = vunpack.c.h.b16 %v197
    %v607 = vunpack.c.l.b16 %v198
    %v608 = vunpack.c.h.b16 %v198
    %v609 = vunpack.c.l.b16 %v199
    %v610 = vunpack.c.h.b16 %v199
    %v611 = vunpack.c.l.b16 %v200
    %v612 = vunpack.c.h.b16 %v200
    %v613 = vunpack.c.l.b16 %v201
    %v614 = vunpack.c.h.b16 %v201
    %v615 = vunpack.c.l.b16 %v202
    %v616 = vunpack.c.h.b16 %v202
    %v617 = vunpack.c.l.b16 %v203
    %v618 = vunpack.c.h.b16 %v203
    %v619 = vunpack.c.l.b16 %v204
    %v620 = vunpack.c.h.b16 %v204
    %v621 = vunpack.c.l.b16 %v205
    %v622 = vunpack.c.h.b16 %v205
    %v623 = vunpack.c.l.b16 %v206
    %v624 = vunpack.c.h.b16 %v206
    %v625 = vunpack.c.l.b16 %v207
    %v626 = vunpack.c.h.b16 %v207
    %v627 = vunpack.c.l.b16 %v208
    %v628 = vunpack.c.h.b16 %v208
    %v629 = vunpack.c.l.b16 %v209
    %v630 = vunpack.c.h.b16 %v209
    %v631 = vunpack.c.l.b16 %v210
    %v632 = vunpack.c.h.b16 %v210
    %v633 = vunpack.c.l.b16 %v211
    %v634 = vunpack.c.h.b16 %v211
    %v635 = vunpack.c.l.b16 %v212
    %v636 = vunpack.c.h.b16 %v212
    %v637 = vunpack.c.l.b16 %v213
    %v638 = vunpack.c.h.b16 %v213
    %v639 = vunpack.c.l.b16 %v214
    %v640 = vunpack.c.h.b16 %v214
    %v641 = vpack.c.b16 %v389, %v385
    %v642 = vpack.c.b16 %v390, %v386
    %v643 = vpack.c.b16 %v391, %v387
    %v644 = vpack.c.b16 %v392, %v388
    %v645 = vpack.c.b16 %v397, %v393
    %v646 = vpack.c.b16 %v398, %v394
    %v647 = vpack.c.b16 %v399, %v395
    %v648 = vpack.c.b16 %v400, %v396
    %v649 = vpack.c.b16 %v405, %v401
    %v650 = vpack.c.b16 %v406, %v402
    %v651 = vpack.c.b16 %v407, %v403
    %v652 = vpack.c.b16 %v408, %v404
    %v653 = vpack.c.b16 %v413, %v409
    %v654 = vpack.c.b16 %v414, %v410
    %v655 = vpack.c.b16 %v415, %v411
    %v656 = vpack.c.b16 %v416, %v412
    %v657 = vpack.c.b16 %v421, %v417
    %v658 = vpack.c.b16 %v422, %v418
    %v659 = vpack.c.b16 %v423, %v419
    %v660 = vpack.c.b16 %v424, %v420
    %v661 = vpack.c.b16 %v429, %v425
    %v662 = vpack.c.b16 %v430, %v426
    %v663 = vpack.c.b16 %v431, %v427
    %v664 = vpack.c.b16 %v432, %v428
    %v665 = vpack.c.b16 %v437, %v433
    %v666 = vpack.c.b16 %v438, %v434
    %v667 = vpack.c.b16 %v439, %v435
    %v668 = vpack.c.b16 %v440, %v436
    %v669 = vpack.c.b16 %v445, %v441
    %v670 = vpack.c.b16 %v446, %v442
    %v671 = vpack.c.b16 %v447, %v443
    %v672 = vpack.c.b16 %v448, %v444
    %v673 = vpack.c.b16 %v453, %v449
    %v674 = vpack.c.b16 %v454, %v450
    %v675 = vpack.c.b16 %v455, %v451
    %v676 = vpack.c.b16 %v456, %v452
    %v677 = vpack.c.b16 %v461, %v457
    %v678 = vpack.c.b16 %v462, %v458
    %v679 = vpack.c.b16 %v463, %v459
    %v680 = vpack.c.b16 %v464, %v460
    %v681 = vpack.c.b16 %v469, %v465
    %v682 = vpack.c.b16 %v470, %v466
    %v683 = vpack.c.b16 %v471, %v467
    %v684 = vpack.c.b16 %v472, %v468
    %v685 = vpack.c.b16 %v477, %v473
    %v686 = vpack.c.b16 %v478, %v474
    %v687 = vpack.c.b16 %v479, %v475
    %v688 = vpack.c.b16 %v480, %v476
    %v689 = vpack.c.b16 %v485, %v481
    %v690 = vpack.c.b16 %v486, %v482
    %v691 = vpack.c.b16 %v487, %v483
    %v692 = vpack.c.b16 %v488, %v484
    %v693 = vpack.c.b16 %v493, %v489
    %v694 = vpack.c.b16 %v494, %v490
    %v695 = vpack.c.b16 %v495, %v491
    %v696 = vpack.c.b16 %v496, %v492
    %v697 = vpack.c.b16 %v501, %v497
    %v698 = vpack.c.b16 %v502, %v498
    %v699 = vpack.c.b16 %v503, %v499
    %v700 = vpack.c.b16 %v504, %v500
    %v701 = vpack.c.b16 %v509, %v505
    %v702 = vpack.c.b16 %v510, %v506
    %v703 = vpack.c.b16 %v511, %v507
    %v704 = vpack.c.b16 %v512, %v508
    %v705 = vpack.c.b16 %v517, %v513
    %v706 = vpack.c.b16 %v518, %v514
    %v707 = vpack.c.b16 %v519, %v515
    %v708 = vpack.c.b16 %v520, %v516
    %v709 = vpack.c.b16 %v525, %v521
    %v710 = vpack.c.b16 %v526, %v522
    %v711 = vpack.c.b16 %v527, %v523
    %v712 = vpack.c.b16 %v528, %v524
    %v713 = vpack.c.b16 %v533, %v529
    %v714 = vpack.c.b16 %v534, %v530
    %v715 = vpack.c.b16 %v535, %v531
    %v716 = vpack.c.b16 %v536, %v532
    %v717 = vpack.c.b16 %v541, %v537
    %v718 = vpack.c.b16 %v542, %v538
    %v719 = vpack.c.b16 %v543, %v539
    %v720 = vpack.c.b16 %v544, %v540
    %v721 = vpack.c.b16 %v549, %v545
    %v722 = vpack.c.b16 %v550, %v546
    %v723 = vpack.c.b16 %v551, %v547
    %v724 = vpack.c.b16 %v552, %v548
    %v725 = vpack.c.b16 %v557, %v553
    %v726 = vpack.c.b16 %v558, %v554
    %v727 = vpack.c.b16 %v559, %v555
    %v728 = vpack.c.b16 %v560, %v556
    %v729 = vpack.c.b16 %v565, %v561
    %v730 = vpack.c.b16 %v566, %v562
    %v731 = vpack.c.b16 %v567, %v563
    %v732 = vpack.c.b16 %v568, %v564
    %v733 = vpack.c.b16 %v573, %v569
    %v734 = vpack.c.b16 %v574, %v570
    %v735 = vpack.c.b16 %v575, %v571
    %v736 = vpack.c.b16 %v576, %v572
    %v737 = vpack.c.b16 %v581, %v577
    %v738 = vpack.c.b16 %v582, %v578
    %v739 = vpack.c.b16 %v583, %v579
    %v740 = vpack.c.b16 %v584, %v580
    %v741 = vpack.c.b16 %v589, %v585
    %v742 = vpack.c.b16 %v590, %v586
    %v743 = vpack.c.b16 %v591, %v587
    %v744 = vpack.c.b16 %v592, %v588
    %v745 = vpack.c.b16 %v597, %v593
    %v746 = vpack.c.b16 %v598, %v594
    %v747 = vpack.c.b16 %v599, %v595
    %v748 = vpack.c.b16 %v600, %v596
    %v749 = vpack.c.b16 %v605, %v601
    %v750 = vpack.c.b16 %v606, %v602
    %v751 = vpack.c.b16 %v607, %v603
    %v752 = vpack.c.b16 %v608, %v604
    %v753 = vpack.c.b16 %v613, %v609
    %v754 = vpack.c.b16 %v614, %v610
    %v755 = vpack.c.b16 %v615, %v611
    %v756 = vpack.c.b16 %v616, %v612
    %v757 = vpack.c.b16 %v621, %v617
    %v758 = vpack.c.b16 %v622, %v618
    %v759 = vpack.c.b16 %v623, %v619
    %v760 = vpack.c.b16 %v624, %v620
    %v761 = vpack.c.b16 %v629, %v625
    %v762 = vpack.c.b16 %v630, %v626
    %v763 = vpack.c.b16 %v631, %v627
    %v764 = vpack.c.b16 %v632, %v628
    %v765 = vpack.c.b16 %v637, %v633
    %v766 = vpack.c.b16 %v638, %v634
    %v767 = vpack.c.b16 %v639, %v635
    %v768 = vpack.c.b16 %v640, %v636
    %897 = vmatprep.subr.bf16.mxu0 %v642
    %898 = vmatpush1.bf16.msra.mxu0 %v641
    %899 = vmatprep.subr.bf16.mxu0 %v646
    %900 = vmatpush1.bf16.msra.mxu0 %v645
    %901 = vmatprep.subr.bf16.mxu0 %v650
    %902 = vmatpush1.bf16.msra.mxu0 %v649
    %903 = vmatprep.subr.bf16.mxu0 %v654
    %904 = vmatpush1.bf16.msra.mxu0 %v653
    %905 = vmatprep.subr.bf16.mxu0 %v658
    %906 = vmatpush1.bf16.msra.mxu0 %v657
    %907 = vmatprep.subr.bf16.mxu0 %v662
    %908 = vmatpush1.bf16.msra.mxu0 %v661
    %909 = vmatprep.subr.bf16.mxu0 %v666
    %910 = vmatpush1.bf16.msra.mxu0 %v665
    %911 = vmatprep.subr.bf16.mxu0 %v670
    %912 = vmatpush1.bf16.msra.mxu0 %v669
    %913 = vmatprep.subr.bf16.mxu0 %v674
    %914 = vmatpush1.bf16.msra.mxu0 %v673
    %915 = vmatprep.subr.bf16.mxu0 %v678
    %916 = vmatpush1.bf16.msra.mxu0 %v677
    %917 = vmatprep.subr.bf16.mxu0 %v682
    %918 = vmatpush1.bf16.msra.mxu0 %v681
    %919 = vmatprep.subr.bf16.mxu0 %v686
    %920 = vmatpush1.bf16.msra.mxu0 %v685
    %921 = vmatprep.subr.bf16.mxu0 %v690
    %922 = vmatpush1.bf16.msra.mxu0 %v689
    %923 = vmatprep.subr.bf16.mxu0 %v694
    %924 = vmatpush1.bf16.msra.mxu0 %v693
    %925 = vmatprep.subr.bf16.mxu0 %v698
    %926 = vmatpush1.bf16.msra.mxu0 %v697
    %927 = vmatprep.subr.bf16.mxu0 %v702
    %928 = vmatpush1.bf16.msra.mxu0 %v701
    %929 = vmatprep.mubr.bf16.mxu0 %v250
    %930 = vmatmul.mubr.bf16.gmra.mrb[0].mxu0 %v249
    %v931 = vpop.f32.mrb[0].mxu0
    %v932 = vadd.f32 %v220, %v931
    %v933 = vpop.f32.mrb[0].mxu0
    %v934 = vadd.f32 %v224, %v933
    %v935 = vpop.f32.mrb[0].mxu0
    %v936 = vadd.f32 %v220, %v935
    %v937 = vpop.f32.mrb[0].mxu0
    %v938 = vadd.f32 %v224, %v937
    %939 = vdwg.mxu0
    %940 = vmatprep.subr.bf16.mxu0 %v706
    %941 = vmatpush1.bf16.msra.mxu0 %v705
    %942 = vmatprep.subr.bf16.mxu0 %v710
    %943 = vmatpush1.bf16.msra.mxu0 %v709
    %944 = vmatprep.subr.bf16.mxu0 %v714
    %945 = vmatpush1.bf16.msra.mxu0 %v713
    %946 = vmatprep.subr.bf16.mxu0 %v718
    %947 = vmatpush1.bf16.msra.mxu0 %v717
    %948 = vmatprep.subr.bf16.mxu0 %v722
    %949 = vmatpush1.bf16.msra.mxu0 %v721
    %950 = vmatprep.subr.bf16.mxu0 %v726
    %951 = vmatpush1.bf16.msra.mxu0 %v725
    %952 = vmatprep.subr.bf16.mxu0 %v730
    %953 = vmatpush1.bf16.msra.mxu0 %v729
    %954 = vmatprep.subr.bf16.mxu0 %v734
    %955 = vmatpush1.bf16.msra.mxu0 %v733
    %956 = vmatprep.subr.bf16.mxu0 %v738
    %957 = vmatpush1.bf16.msra.mxu0 %v737
    %958 = vmatprep.subr.bf16.mxu0 %v742
    %959 = vmatpush1.bf16.msra.mxu0 %v741
    %960 = vmatprep.subr.bf16.mxu0 %v746
    %961 = vmatpush1.bf16.msra.mxu0 %v745
    %962 = vmatprep.subr.bf16.mxu0 %v750
    %963 = vmatpush1.bf16.msra.mxu0 %v749
    %964 = vmatprep.subr.bf16.mxu0 %v754
    %965 = vmatpush1.bf16.msra.mxu0 %v753
    %966 = vmatprep.subr.bf16.mxu0 %v758
    %967 = vmatpush1.bf16.msra.mxu0 %v757
    %968 = vmatprep.subr.bf16.mxu0 %v762
    %969 = vmatpush1.bf16.msra.mxu0 %v761
    %970 = vmatprep.subr.bf16.mxu0 %v766
    %971 = vmatpush1.bf16.msra.mxu0 %v765
    %972 = vmatprep.mubr.bf16.mxu0 %v252
    %973 = vmatmul.mubr.bf16.gmra.mrb[0].mxu0 %v251
    %v974 = vpop.f32.mrb[0].mxu0
    %v975 = vadd.f32 %v932, %v974
    %v976 = vpop.f32.mrb[0].mxu0
    %v977 = vadd.f32 %v934, %v976
    %v978 = vpop.f32.mrb[0].mxu0
    %v979 = vadd.f32 %v936, %v978
    %v980 = vpop.f32.mrb[0].mxu0
    %v981 = vadd.f32 %v938, %v980
    %982 = vdwg.mxu0
    %983 = vmatprep.subr.bf16.mxu0 %v644
    %984 = vmatpush1.bf16.msra.mxu0 %v643
    %985 = vmatprep.subr.bf16.mxu0 %v648
    %986 = vmatpush1.bf16.msra.mxu0 %v647
    %987 = vmatprep.subr.bf16.mxu0 %v652
    %988 = vmatpush1.bf16.msra.mxu0 %v651
    %989 = vmatprep.subr.bf16.mxu0 %v656
    %990 = vmatpush1.bf16.msra.mxu0 %v655
    %991 = vmatprep.subr.bf16.mxu0 %v660
    %992 = vmatpush1.bf16.msra.mxu0 %v659
    %993 = vmatprep.subr.bf16.mxu0 %v664
    %994 = vmatpush1.bf16.msra.mxu0 %v663
    %995 = vmatprep.subr.bf16.mxu0 %v668
    %996 = vmatpush1.bf16.msra.mxu0 %v667
    %997 = vmatprep.subr.bf16.mxu0 %v672
    %998 = vmatpush1.bf16.msra.mxu0 %v671
    %999 = vmatprep.subr.bf16.mxu0 %v676
    %1000 = vmatpush1.bf16.msra.mxu0 %v675
    %1001 = vmatprep.subr.bf16.mxu0 %v680
    %1002 = vmatpush1.bf16.msra.mxu0 %v679
    %1003 = vmatprep.subr.bf16.mxu0 %v684
    %1004 = vmatpush1.bf16.msra.mxu0 %v683
    %1005 = vmatprep.subr.bf16.mxu0 %v688
    %1006 = vmatpush1.bf16.msra.mxu0 %v687
    %1007 = vmatprep.subr.bf16.mxu0 %v692
    %1008 = vmatpush1.bf16.msra.mxu0 %v691
    %1009 = vmatprep.subr.bf16.mxu0 %v696
    %1010 = vmatpush1.bf16.msra.mxu0 %v695
    %1011 = vmatprep.subr.bf16.mxu0 %v700
    %1012 = vmatpush1.bf16.msra.mxu0 %v699
    %1013 = vmatprep.subr.bf16.mxu0 %v704
    %1014 = vmatpush1.bf16.msra.mxu0 %v703
    %1015 = vmatprep.mubr.bf16.mxu0 %v250
    %1016 = vmatmul.mubr.bf16.gmra.mrb[0].mxu0 %v249
    %v1017 = vpop.f32.mrb[0].mxu0
    %v1018 = vadd.f32 %v228, %v1017
    %v1019 = vpop.f32.mrb[0].mxu0
    %v1020 = vadd.f32 %v232, %v1019
    %v1021 = vpop.f32.mrb[0].mxu0
    %v1022 = vadd.f32 %v228, %v1021
    %v1023 = vpop.f32.mrb[0].mxu0
    %v1024 = vadd.f32 %v232, %v1023
    %1025 = vdwg.mxu0
    %1026 = vmatprep.subr.bf16.mxu0 %v708
    %1027 = vmatpush1.bf16.msra.mxu0 %v707
    %1028 = vmatprep.subr.bf16.mxu0 %v712
    %1029 = vmatpush1.bf16.msra.mxu0 %v711
    %1030 = vmatprep.subr.bf16.mxu0 %v716
    %1031 = vmatpush1.bf16.msra.mxu0 %v715
    %1032 = vmatprep.subr.bf16.mxu0 %v720
    %1033 = vmatpush1.bf16.msra.mxu0 %v719
    %1034 = vmatprep.subr.bf16.mxu0 %v724
    %1035 = vmatpush1.bf16.msra.mxu0 %v723
    %1036 = vmatprep.subr.bf16.mxu0 %v728
    %1037 = vmatpush1.bf16.msra.mxu0 %v727
    %1038 = vmatprep.subr.bf16.mxu0 %v732
    %1039 = vmatpush1.bf16.msra.mxu0 %v731
    %1040 = vmatprep.subr.bf16.mxu0 %v736
    %1041 = vmatpush1.bf16.msra.mxu0 %v735
    %1042 = vmatprep.subr.bf16.mxu0 %v740
    %1043 = vmatpush1.bf16.msra.mxu0 %v739
    %1044 = vmatprep.subr.bf16.mxu0 %v744
    %1045 = vmatpush1.bf16.msra.mxu0 %v743
    %1046 = vmatprep.subr.bf16.mxu0 %v748
    %1047 = vmatpush1.bf16.msra.mxu0 %v747
    %1048 = vmatprep.subr.bf16.mxu0 %v752
    %1049 = vmatpush1.bf16.msra.mxu0 %v751
    %1050 = vmatprep.subr.bf16.mxu0 %v756
    %1051 = vmatpush1.bf16.msra.mxu0 %v755
    %1052 = vmatprep.subr.bf16.mxu0 %v760
    %1053 = vmatpush1.bf16.msra.mxu0 %v759
    %1054 = vmatprep.subr.bf16.mxu0 %v764
    %1055 = vmatpush1.bf16.msra.mxu0 %v763
    %1056 = vmatprep.subr.bf16.mxu0 %v768
    %1057 = vmatpush1.bf16.msra.mxu0 %v767
    %1058 = vmatprep.mubr.bf16.mxu0 %v252
    %1059 = vmatmul.mubr.bf16.gmra.mrb[0].mxu0 %v251
    %v1060 = vpop.f32.mrb[0].mxu0
    %v1061 = vadd.f32 %v1018, %v1060
    %v1062 = vpop.f32.mrb[0].mxu0
    %v1063 = vadd.f32 %v1020, %v1062
    %v1064 = vpop.f32.mrb[0].mxu0
    %v1065 = vadd.f32 %v1022, %v1064
    %v1066 = vpop.f32.mrb[0].mxu0
    %v1067 = vadd.f32 %v1024, %v1066
    %1068 = vdwg.mxu0
    %v1069 = vmax.f32 %v975, 0.0
    %v1070 = vmax.f32 %v977, 0.0
    %v1071 = vmax.f32 %v1061, 0.0
    %v1072 = vmax.f32 %v1063, 0.0
    %v1073 = vmax.f32 %v979, 0.0
    %v1074 = vmax.f32 %v981, 0.0
    %v1075 = vmax.f32 %v1065, 0.0
    %v1076 = vmax.f32 %v1067, 0.0
    %v1077 = vpack.c.bf16 %v1073, %v1069
    %v1078 = vpack.c.bf16 %v1074, %v1070
    %v1079 = vpack.c.bf16 %v1075, %v1071
    %v1080 = vpack.c.bf16 %v1076, %v1072
    %v1081 = vld [vmem:[#allocation7] sm:$0xff]
    %v1082 = vld [vmem:[#allocation7 + $0x8] sm:$0xff]
    %v1083 = vld [vmem:[#allocation7 + $0x10] sm:$0xff]
    %v1084 = vld [vmem:[#allocation7 + $0x18] sm:$0xff]
    %v1085 = vld [vmem:[#allocation7 + $0x20] sm:$0xff]
    %v1086 = vld [vmem:[#allocation7 + $0x28] sm:$0xff]
    %v1087 = vld [vmem:[#allocation7 + $0x30] sm:$0xff]
    %v1088 = vld [vmem:[#allocation7 + $0x38] sm:$0xff]
    %v1089 = vld [vmem:[#allocation7 + $0x40] sm:$0xff]
    %v1090 = vld [vmem:[#allocation7 + $0x48] sm:$0xff]
    %v1091 = vld [vmem:[#allocation7 + $0x50] sm:$0xff]
    %v1092 = vld [vmem:[#allocation7 + $0x58] sm:$0xff]
    %v1093 = vld [vmem:[#allocation7 + $0x60] sm:$0xff]
    %v1094 = vld [vmem:[#allocation7 + $0x68] sm:$0xff]
    %v1095 = vld [vmem:[#allocation7 + $0x70] sm:$0xff]
    %v1096 = vld [vmem:[#allocation7 + $0x78] sm:$0xff]
    %v1097 = vld [vmem:[#allocation7 + $0x80] sm:$0xff]
    %v1098 = vld [vmem:[#allocation7 + $0x88] sm:$0xff]
    %v1099 = vld [vmem:[#allocation7 + $0x90] sm:$0xff]
    %v1100 = vld [vmem:[#allocation7 + $0x98] sm:$0xff]
    %v1101 = vld [vmem:[#allocation7 + $0xa0] sm:$0xff]
    %v1102 = vld [vmem:[#allocation7 + $0xa8] sm:$0xff]
    %v1103 = vld [vmem:[#allocation7 + $0xb0] sm:$0xff]
    %v1104 = vld [vmem:[#allocation7 + $0xb8] sm:$0xff]
    %v1105 = vld [vmem:[#allocation7 + $0xc0] sm:$0xff]
    %v1106 = vld [vmem:[#allocation7 + $0xc8] sm:$0xff]
    %v1107 = vld [vmem:[#allocation7 + $0xd0] sm:$0xff]
    %v1108 = vld [vmem:[#allocation7 + $0xd8] sm:$0xff]
    %v1109 = vld [vmem:[#allocation7 + $0xe0] sm:$0xff]
    %v1110 = vld [vmem:[#allocation7 + $0xe8] sm:$0xff]
    %v1111 = vld [vmem:[#allocation7 + $0xf0] sm:$0xff]
    %v1112 = vld [vmem:[#allocation7 + $0xf8] sm:$0xff]
    %v1113 = vld [vmem:[#allocation7 + $0x100] sm:$0xff]
    %v1114 = vld [vmem:[#allocation7 + $0x108] sm:$0xff]
    %v1115 = vld [vmem:[#allocation7 + $0x110] sm:$0xff]
    %v1116 = vld [vmem:[#allocation7 + $0x118] sm:$0xff]
    %v1117 = vld [vmem:[#allocation7 + $0x120] sm:$0xff]
    %v1118 = vld [vmem:[#allocation7 + $0x128] sm:$0xff]
    %v1119 = vld [vmem:[#allocation7 + $0x130] sm:$0xff]
    %v1120 = vld [vmem:[#allocation7 + $0x138] sm:$0xff]
    %v1121 = vld [vmem:[#allocation7 + $0x140] sm:$0xff]
    %v1122 = vld [vmem:[#allocation7 + $0x148] sm:$0xff]
    %v1123 = vld [vmem:[#allocation7 + $0x150] sm:$0xff]
    %v1124 = vld [vmem:[#allocation7 + $0x158] sm:$0xff]
    %v1125 = vld [vmem:[#allocation7 + $0x160] sm:$0xff]
    %v1126 = vld [vmem:[#allocation7 + $0x168] sm:$0xff]
    %v1127 = vld [vmem:[#allocation7 + $0x170] sm:$0xff]
    %v1128 = vld [vmem:[#allocation7 + $0x178] sm:$0xff]
    %v1129 = vld [vmem:[#allocation7 + $0x180] sm:$0xff]
    %v1130 = vld [vmem:[#allocation7 + $0x188] sm:$0xff]
    %v1131 = vld [vmem:[#allocation7 + $0x190] sm:$0xff]
    %v1132 = vld [vmem:[#allocation7 + $0x198] sm:$0xff]
    %v1133 = vld [vmem:[#allocation7 + $0x1a0] sm:$0xff]
    %v1134 = vld [vmem:[#allocation7 + $0x1a8] sm:$0xff]
    %v1135 = vld [vmem:[#allocation7 + $0x1b0] sm:$0xff]
    %v1136 = vld [vmem:[#allocation7 + $0x1b8] sm:$0xff]
    %v1137 = vld [vmem:[#allocation7 + $0x1c0] sm:$0xff]
    %v1138 = vld [vmem:[#allocation7 + $0x1c8] sm:$0xff]
    %v1139 = vld [vmem:[#allocation7 + $0x1d0] sm:$0xff]
    %v1140 = vld [vmem:[#allocation7 + $0x1d8] sm:$0xff]
    %v1141 = vld [vmem:[#allocation7 + $0x1e0] sm:$0xff]
    %v1142 = vld [vmem:[#allocation7 + $0x1e8] sm:$0xff]
    %v1143 = vld [vmem:[#allocation7 + $0x1f0] sm:$0xff]
    %v1144 = vld [vmem:[#allocation7 + $0x1f8] sm:$0xff]
    %v1145 = vld [vmem:[#allocation7 + $0x200] sm:$0xff]
    %v1146 = vld [vmem:[#allocation7 + $0x208] sm:$0xff]
    %v1147 = vld [vmem:[#allocation7 + $0x210] sm:$0xff]
    %v1148 = vld [vmem:[#allocation7 + $0x218] sm:$0xff]
    %v1149 = vld [vmem:[#allocation7 + $0x220] sm:$0xff]
    %v1150 = vld [vmem:[#allocation7 + $0x228] sm:$0xff]
    %v1151 = vld [vmem:[#allocation7 + $0x230] sm:$0xff]
    %v1152 = vld [vmem:[#allocation7 + $0x238] sm:$0xff]
    %v1153 = vld [vmem:[#allocation7 + $0x240] sm:$0xff]
    %v1154 = vld [vmem:[#allocation7 + $0x248] sm:$0xff]
    %v1155 = vld [vmem:[#allocation7 + $0x250] sm:$0xff]
    %v1156 = vld [vmem:[#allocation7 + $0x258] sm:$0xff]
    %v1157 = vld [vmem:[#allocation7 + $0x260] sm:$0xff]
    %v1158 = vld [vmem:[#allocation7 + $0x268] sm:$0xff]
    %v1159 = vld [vmem:[#allocation7 + $0x270] sm:$0xff]
    %v1160 = vld [vmem:[#allocation7 + $0x278] sm:$0xff]
    %v1161 = vld [vmem:[#allocation7 + $0x280] sm:$0xff]
    %v1162 = vld [vmem:[#allocation7 + $0x288] sm:$0xff]
    %v1163 = vld [vmem:[#allocation7 + $0x290] sm:$0xff]
    %v1164 = vld [vmem:[#allocation7 + $0x298] sm:$0xff]
    %v1165 = vld [vmem:[#allocation7 + $0x2a0] sm:$0xff]
    %v1166 = vld [vmem:[#allocation7 + $0x2a8] sm:$0xff]
    %v1167 = vld [vmem:[#allocation7 + $0x2b0] sm:$0xff]
    %v1168 = vld [vmem:[#allocation7 + $0x2b8] sm:$0xff]
    %v1169 = vld [vmem:[#allocation7 + $0x2c0] sm:$0xff]
    %v1170 = vld [vmem:[#allocation7 + $0x2c8] sm:$0xff]
    %v1171 = vld [vmem:[#allocation7 + $0x2d0] sm:$0xff]
    %v1172 = vld [vmem:[#allocation7 + $0x2d8] sm:$0xff]
    %v1173 = vld [vmem:[#allocation7 + $0x2e0] sm:$0xff]
    %v1174 = vld [vmem:[#allocation7 + $0x2e8] sm:$0xff]
    %v1175 = vld [vmem:[#allocation7 + $0x2f0] sm:$0xff]
    %v1176 = vld [vmem:[#allocation7 + $0x2f8] sm:$0xff]
    %v1177 = vld [vmem:[#allocation7 + $0x300] sm:$0xff]
    %v1178 = vld [vmem:[#allocation7 + $0x308] sm:$0xff]
    %v1179 = vld [vmem:[#allocation7 + $0x310] sm:$0xff]
    %v1180 = vld [vmem:[#allocation7 + $0x318] sm:$0xff]
    %v1181 = vld [vmem:[#allocation7 + $0x320] sm:$0xff]
    %v1182 = vld [vmem:[#allocation7 + $0x328] sm:$0xff]
    %v1183 = vld [vmem:[#allocation7 + $0x330] sm:$0xff]
    %v1184 = vld [vmem:[#allocation7 + $0x338] sm:$0xff]
    %v1185 = vld [vmem:[#allocation7 + $0x340] sm:$0xff]
    %v1186 = vld [vmem:[#allocation7 + $0x348] sm:$0xff]
    %v1187 = vld [vmem:[#allocation7 + $0x350] sm:$0xff]
    %v1188 = vld [vmem:[#allocation7 + $0x358] sm:$0xff]
    %v1189 = vld [vmem:[#allocation7 + $0x360] sm:$0xff]
    %v1190 = vld [vmem:[#allocation7 + $0x368] sm:$0xff]
    %v1191 = vld [vmem:[#allocation7 + $0x370] sm:$0xff]
    %v1192 = vld [vmem:[#allocation7 + $0x378] sm:$0xff]
    %v1193 = vld [vmem:[#allocation7 + $0x380] sm:$0xff]
    %v1194 = vld [vmem:[#allocation7 + $0x388] sm:$0xff]
    %v1195 = vld [vmem:[#allocation7 + $0x390] sm:$0xff]
    %v1196 = vld [vmem:[#allocation7 + $0x398] sm:$0xff]
    %v1197 = vld [vmem:[#allocation7 + $0x3a0] sm:$0xff]
    %v1198 = vld [vmem:[#allocation7 + $0x3a8] sm:$0xff]
    %v1199 = vld [vmem:[#allocation7 + $0x3b0] sm:$0xff]
    %v1200 = vld [vmem:[#allocation7 + $0x3b8] sm:$0xff]
    %v1201 = vld [vmem:[#allocation7 + $0x3c0] sm:$0xff]
    %v1202 = vld [vmem:[#allocation7 + $0x3c8] sm:$0xff]
    %v1203 = vld [vmem:[#allocation7 + $0x3d0] sm:$0xff]
    %v1204 = vld [vmem:[#allocation7 + $0x3d8] sm:$0xff]
    %v1205 = vld [vmem:[#allocation7 + $0x3e0] sm:$0xff]
    %v1206 = vld [vmem:[#allocation7 + $0x3e8] sm:$0xff]
    %v1207 = vld [vmem:[#allocation7 + $0x3f0] sm:$0xff]
    %v1208 = vld [vmem:[#allocation7 + $0x3f8] sm:$0xff]
    %v1209 = vld [vmem:[%s4] sm:$0xf]
    %v1211 = vlaneseq
    %v1212 = vshrl.u32 %v1211, 7
    %v1213 = vsub.s32 0, %v1212
    %v1214 = vrot.slane %v1209, %v1213
    %v1215 = vlaneseq
    %v1216 = vshrl.u32 %v1215, 7
    %v1217 = vsub.s32 1, %v1216
    %v1218 = vrot.slane %v1209, %v1217
    %v1219 = vlaneseq
    %v1220 = vshrl.u32 %v1219, 7
    %v1221 = vsub.s32 2, %v1220
    %v1222 = vrot.slane %v1209, %v1221
    %v1223 = vlaneseq
    %v1224 = vshrl.u32 %v1223, 7
    %v1225 = vsub.s32 3, %v1224
    %v1226 = vrot.slane %v1209, %v1225
    %v1359 = vunpack.c.l.b16 %v1081
    %v1360 = vunpack.c.h.b16 %v1081
    %v1361 = vunpack.c.l.b16 %v1082
    %v1362 = vunpack.c.h.b16 %v1082
    %v1363 = vunpack.c.l.b16 %v1083
    %v1364 = vunpack.c.h.b16 %v1083
    %v1365 = vunpack.c.l.b16 %v1084
    %v1366 = vunpack.c.h.b16 %v1084
    %v1367 = vunpack.c.l.b16 %v1085
    %v1368 = vunpack.c.h.b16 %v1085
    %v1369 = vunpack.c.l.b16 %v1086
    %v1370 = vunpack.c.h.b16 %v1086
    %v1371 = vunpack.c.l.b16 %v1087
    %v1372 = vunpack.c.h.b16 %v1087
    %v1373 = vunpack.c.l.b16 %v1088
    %v1374 = vunpack.c.h.b16 %v1088
    %v1375 = vunpack.c.l.b16 %v1089
    %v1376 = vunpack.c.h.b16 %v1089
    %v1377 = vunpack.c.l.b16 %v1090
    %v1378 = vunpack.c.h.b16 %v1090
    %v1379 = vunpack.c.l.b16 %v1091
    %v1380 = vunpack.c.h.b16 %v1091
    %v1381 = vunpack.c.l.b16 %v1092
    %v1382 = vunpack.c.h.b16 %v1092
    %v1383 = vunpack.c.l.b16 %v1093
    %v1384 = vunpack.c.h.b16 %v1093
    %v1385 = vunpack.c.l.b16 %v1094
    %v1386 = vunpack.c.h.b16 %v1094
    %v1387 = vunpack.c.l.b16 %v1095
    %v1388 = vunpack.c.h.b16 %v1095
    %v1389 = vunpack.c.l.b16 %v1096
    %v1390 = vunpack.c.h.b16 %v1096
    %v1391 = vunpack.c.l.b16 %v1097
    %v1392 = vunpack.c.h.b16 %v1097
    %v1393 = vunpack.c.l.b16 %v1098
    %v1394 = vunpack.c.h.b16 %v1098
    %v1395 = vunpack.c.l.b16 %v1099
    %v1396 = vunpack.c.h.b16 %v1099
    %v1397 = vunpack.c.l.b16 %v1100
    %v1398 = vunpack.c.h.b16 %v1100
    %v1399 = vunpack.c.l.b16 %v1101
    %v1400 = vunpack.c.h.b16 %v1101
    %v1401 = vunpack.c.l.b16 %v1102
    %v1402 = vunpack.c.h.b16 %v1102
    %v1403 = vunpack.c.l.b16 %v1103
    %v1404 = vunpack.c.h.b16 %v1103
    %v1405 = vunpack.c.l.b16 %v1104
    %v1406 = vunpack.c.h.b16 %v1104
    %v1407 = vunpack.c.l.b16 %v1105
    %v1408 = vunpack.c.h.b16 %v1105
    %v1409 = vunpack.c.l.b16 %v1106
    %v1410 = vunpack.c.h.b16 %v1106
    %v1411 = vunpack.c.l.b16 %v1107
    %v1412 = vunpack.c.h.b16 %v1107
    %v1413 = vunpack.c.l.b16 %v1108
    %v1414 = vunpack.c.h.b16 %v1108
    %v1415 = vunpack.c.l.b16 %v1109
    %v1416 = vunpack.c.h.b16 %v1109
    %v1417 = vunpack.c.l.b16 %v1110
    %v1418 = vunpack.c.h.b16 %v1110
    %v1419 = vunpack.c.l.b16 %v1111
    %v1420 = vunpack.c.h.b16 %v1111
    %v1421 = vunpack.c.l.b16 %v1112
    %v1422 = vunpack.c.h.b16 %v1112
    %v1423 = vunpack.c.l.b16 %v1113
    %v1424 = vunpack.c.h.b16 %v1113
    %v1425 = vunpack.c.l.b16 %v1114
    %v1426 = vunpack.c.h.b16 %v1114
    %v1427 = vunpack.c.l.b16 %v1115
    %v1428 = vunpack.c.h.b16 %v1115
    %v1429 = vunpack.c.l.b16 %v1116
    %v1430 = vunpack.c.h.b16 %v1116
    %v1431 = vunpack.c.l.b16 %v1117
    %v1432 = vunpack.c.h.b16 %v1117
    %v1433 = vunpack.c.l.b16 %v1118
    %v1434 = vunpack.c.h.b16 %v1118
    %v1435 = vunpack.c.l.b16 %v1119
    %v1436 = vunpack.c.h.b16 %v1119
    %v1437 = vunpack.c.l.b16 %v1120
    %v1438 = vunpack.c.h.b16 %v1120
    %v1439 = vunpack.c.l.b16 %v1121
    %v1440 = vunpack.c.h.b16 %v1121
    %v1441 = vunpack.c.l.b16 %v1122
    %v1442 = vunpack.c.h.b16 %v1122
    %v1443 = vunpack.c.l.b16 %v1123
    %v1444 = vunpack.c.h.b16 %v1123
    %v1445 = vunpack.c.l.b16 %v1124
    %v1446 = vunpack.c.h.b16 %v1124
    %v1447 = vunpack.c.l.b16 %v1125
    %v1448 = vunpack.c.h.b16 %v1125
    %v1449 = vunpack.c.l.b16 %v1126
    %v1450 = vunpack.c.h.b16 %v1126
    %v1451 = vunpack.c.l.b16 %v1127
    %v1452 = vunpack.c.h.b16 %v1127
    %v1453 = vunpack.c.l.b16 %v1128
    %v1454 = vunpack.c.h.b16 %v1128
    %v1455 = vunpack.c.l.b16 %v1129
    %v1456 = vunpack.c.h.b16 %v1129
    %v1457 = vunpack.c.l.b16 %v1130
    %v1458 = vunpack.c.h.b16 %v1130
    %v1459 = vunpack.c.l.b16 %v1131
    %v1460 = vunpack.c.h.b16 %v1131
    %v1461 = vunpack.c.l.b16 %v1132
    %v1462 = vunpack.c.h.b16 %v1132
    %v1463 = vunpack.c.l.b16 %v1133
    %v1464 = vunpack.c.h.b16 %v1133
    %v1465 = vunpack.c.l.b16 %v1134
    %v1466 = vunpack.c.h.b16 %v1134
    %v1467 = vunpack.c.l.b16 %v1135
    %v1468 = vunpack.c.h.b16 %v1135
    %v1469 = vunpack.c.l.b16 %v1136
    %v1470 = vunpack.c.h.b16 %v1136
    %v1471 = vunpack.c.l.b16 %v1137
    %v1472 = vunpack.c.h.b16 %v1137
    %v1473 = vunpack.c.l.b16 %v1138
    %v1474 = vunpack.c.h.b16 %v1138
    %v1475 = vunpack.c.l.b16 %v1139
    %v1476 = vunpack.c.h.b16 %v1139
    %v1477 = vunpack.c.l.b16 %v1140
    %v1478 = vunpack.c.h.b16 %v1140
    %v1479 = vunpack.c.l.b16 %v1141
    %v1480 = vunpack.c.h.b16 %v1141
    %v1481 = vunpack.c.l.b16 %v1142
    %v1482 = vunpack.c.h.b16 %v1142
    %v1483 = vunpack.c.l.b16 %v1143
    %v1484 = vunpack.c.h.b16 %v1143
    %v1485 = vunpack.c.l.b16 %v1144
    %v1486 = vunpack.c.h.b16 %v1144
    %v1487 = vunpack.c.l.b16 %v1145
    %v1488 = vunpack.c.h.b16 %v1145
    %v1489 = vunpack.c.l.b16 %v1146
    %v1490 = vunpack.c.h.b16 %v1146
    %v1491 = vunpack.c.l.b16 %v1147
    %v1492 = vunpack.c.h.b16 %v1147
    %v1493 = vunpack.c.l.b16 %v1148
    %v1494 = vunpack.c.h.b16 %v1148
    %v1495 = vunpack.c.l.b16 %v1149
    %v1496 = vunpack.c.h.b16 %v1149
    %v1497 = vunpack.c.l.b16 %v1150
    %v1498 = vunpack.c.h.b16 %v1150
    %v1499 = vunpack.c.l.b16 %v1151
    %v1500 = vunpack.c.h.b16 %v1151
    %v1501 = vunpack.c.l.b16 %v1152
    %v1502 = vunpack.c.h.b16 %v1152
    %v1503 = vunpack.c.l.b16 %v1153
    %v1504 = vunpack.c.h.b16 %v1153
    %v1505 = vunpack.c.l.b16 %v1154
    %v1506 = vunpack.c.h.b16 %v1154
    %v1507 = vunpack.c.l.b16 %v1155
    %v1508 = vunpack.c.h.b16 %v1155
    %v1509 = vunpack.c.l.b16 %v1156
    %v1510 = vunpack.c.h.b16 %v1156
    %v1511 = vunpack.c.l.b16 %v1157
    %v1512 = vunpack.c.h.b16 %v1157
    %v1513 = vunpack.c.l.b16 %v1158
    %v1514 = vunpack.c.h.b16 %v1158
    %v1515 = vunpack.c.l.b16 %v1159
    %v1516 = vunpack.c.h.b16 %v1159
    %v1517 = vunpack.c.l.b16 %v1160
    %v1518 = vunpack.c.h.b16 %v1160
    %v1519 = vunpack.c.l.b16 %v1161
    %v1520 = vunpack.c.h.b16 %v1161
    %v1521 = vunpack.c.l.b16 %v1162
    %v1522 = vunpack.c.h.b16 %v1162
    %v1523 = vunpack.c.l.b16 %v1163
    %v1524 = vunpack.c.h.b16 %v1163
    %v1525 = vunpack.c.l.b16 %v1164
    %v1526 = vunpack.c.h.b16 %v1164
    %v1527 = vunpack.c.l.b16 %v1165
    %v1528 = vunpack.c.h.b16 %v1165
    %v1529 = vunpack.c.l.b16 %v1166
    %v1530 = vunpack.c.h.b16 %v1166
    %v1531 = vunpack.c.l.b16 %v1167
    %v1532 = vunpack.c.h.b16 %v1167
    %v1533 = vunpack.c.l.b16 %v1168
    %v1534 = vunpack.c.h.b16 %v1168
    %v1535 = vunpack.c.l.b16 %v1169
    %v1536 = vunpack.c.h.b16 %v1169
    %v1537 = vunpack.c.l.b16 %v1170
    %v1538 = vunpack.c.h.b16 %v1170
    %v1539 = vunpack.c.l.b16 %v1171
    %v1540 = vunpack.c.h.b16 %v1171
    %v1541 = vunpack.c.l.b16 %v1172
    %v1542 = vunpack.c.h.b16 %v1172
    %v1543 = vunpack.c.l.b16 %v1173
    %v1544 = vunpack.c.h.b16 %v1173
    %v1545 = vunpack.c.l.b16 %v1174
    %v1546 = vunpack.c.h.b16 %v1174
    %v1547 = vunpack.c.l.b16 %v1175
    %v1548 = vunpack.c.h.b16 %v1175
    %v1549 = vunpack.c.l.b16 %v1176
    %v1550 = vunpack.c.h.b16 %v1176
    %v1551 = vunpack.c.l.b16 %v1177
    %v1552 = vunpack.c.h.b16 %v1177
    %v1553 = vunpack.c.l.b16 %v1178
    %v1554 = vunpack.c.h.b16 %v1178
    %v1555 = vunpack.c.l.b16 %v1179
    %v1556 = vunpack.c.h.b16 %v1179
    %v1557 = vunpack.c.l.b16 %v1180
    %v1558 = vunpack.c.h.b16 %v1180
    %v1559 = vunpack.c.l.b16 %v1181
    %v1560 = vunpack.c.h.b16 %v1181
    %v1561 = vunpack.c.l.b16 %v1182
    %v1562 = vunpack.c.h.b16 %v1182
    %v1563 = vunpack.c.l.b16 %v1183
    %v1564 = vunpack.c.h.b16 %v1183
    %v1565 = vunpack.c.l.b16 %v1184
    %v1566 = vunpack.c.h.b16 %v1184
    %v1567 = vunpack.c.l.b16 %v1185
    %v1568 = vunpack.c.h.b16 %v1185
    %v1569 = vunpack.c.l.b16 %v1186
    %v1570 = vunpack.c.h.b16 %v1186
    %v1571 = vunpack.c.l.b16 %v1187
    %v1572 = vunpack.c.h.b16 %v1187
    %v1573 = vunpack.c.l.b16 %v1188
    %v1574 = vunpack.c.h.b16 %v1188
    %v1575 = vunpack.c.l.b16 %v1189
    %v1576 = vunpack.c.h.b16 %v1189
    %v1577 = vunpack.c.l.b16 %v1190
    %v1578 = vunpack.c.h.b16 %v1190
    %v1579 = vunpack.c.l.b16 %v1191
    %v1580 = vunpack.c.h.b16 %v1191
    %v1581 = vunpack.c.l.b16 %v1192
    %v1582 = vunpack.c.h.b16 %v1192
    %v1583 = vunpack.c.l.b16 %v1193
    %v1584 = vunpack.c.h.b16 %v1193
    %v1585 = vunpack.c.l.b16 %v1194
    %v1586 = vunpack.c.h.b16 %v1194
    %v1587 = vunpack.c.l.b16 %v1195
    %v1588 = vunpack.c.h.b16 %v1195
    %v1589 = vunpack.c.l.b16 %v1196
    %v1590 = vunpack.c.h.b16 %v1196
    %v1591 = vunpack.c.l.b16 %v1197
    %v1592 = vunpack.c.h.b16 %v1197
    %v1593 = vunpack.c.l.b16 %v1198
    %v1594 = vunpack.c.h.b16 %v1198
    %v1595 = vunpack.c.l.b16 %v1199
    %v1596 = vunpack.c.h.b16 %v1199
    %v1597 = vunpack.c.l.b16 %v1200
    %v1598 = vunpack.c.h.b16 %v1200
    %v1599 = vunpack.c.l.b16 %v1201
    %v1600 = vunpack.c.h.b16 %v1201
    %v1601 = vunpack.c.l.b16 %v1202
    %v1602 = vunpack.c.h.b16 %v1202
    %v1603 = vunpack.c.l.b16 %v1203
    %v1604 = vunpack.c.h.b16 %v1203
    %v1605 = vunpack.c.l.b16 %v1204
    %v1606 = vunpack.c.h.b16 %v1204
    %v1607 = vunpack.c.l.b16 %v1205
    %v1608 = vunpack.c.h.b16 %v1205
    %v1609 = vunpack.c.l.b16 %v1206
    %v1610 = vunpack.c.h.b16 %v1206
    %v1611 = vunpack.c.l.b16 %v1207
    %v1612 = vunpack.c.h.b16 %v1207
    %v1613 = vunpack.c.l.b16 %v1208
    %v1614 = vunpack.c.h.b16 %v1208
    %v1615 = vpack.c.b16 %v1363, %v1359
    %v1616 = vpack.c.b16 %v1364, %v1360
    %v1617 = vpack.c.b16 %v1365, %v1361
    %v1618 = vpack.c.b16 %v1366, %v1362
    %v1619 = vpack.c.b16 %v1371, %v1367
    %v1620 = vpack.c.b16 %v1372, %v1368
    %v1621 = vpack.c.b16 %v1373, %v1369
    %v1622 = vpack.c.b16 %v1374, %v1370
    %v1623 = vpack.c.b16 %v1379, %v1375
    %v1624 = vpack.c.b16 %v1380, %v1376
    %v1625 = vpack.c.b16 %v1381, %v1377
    %v1626 = vpack.c.b16 %v1382, %v1378
    %v1627 = vpack.c.b16 %v1387, %v1383
    %v1628 = vpack.c.b16 %v1388, %v1384
    %v1629 = vpack.c.b16 %v1389, %v1385
    %v1630 = vpack.c.b16 %v1390, %v1386
    %v1631 = vpack.c.b16 %v1395, %v1391
    %v1632 = vpack.c.b16 %v1396, %v1392
    %v1633 = vpack.c.b16 %v1397, %v1393
    %v1634 = vpack.c.b16 %v1398, %v1394
    %v1635 = vpack.c.b16 %v1403, %v1399
    %v1636 = vpack.c.b16 %v1404, %v1400
    %v1637 = vpack.c.b16 %v1405, %v1401
    %v1638 = vpack.c.b16 %v1406, %v1402
    %v1639 = vpack.c.b16 %v1411, %v1407
    %v1640 = vpack.c.b16 %v1412, %v1408
    %v1641 = vpack.c.b16 %v1413, %v1409
    %v1642 = vpack.c.b16 %v1414, %v1410
    %v1643 = vpack.c.b16 %v1419, %v1415
    %v1644 = vpack.c.b16 %v1420, %v1416
    %v1645 = vpack.c.b16 %v1421, %v1417
    %v1646 = vpack.c.b16 %v1422, %v1418
    %v1647 = vpack.c.b16 %v1427, %v1423
    %v1648 = vpack.c.b16 %v1428, %v1424
    %v1649 = vpack.c.b16 %v1429, %v1425
    %v1650 = vpack.c.b16 %v1430, %v1426
    %v1651 = vpack.c.b16 %v1435, %v1431
    %v1652 = vpack.c.b16 %v1436, %v1432
    %v1653 = vpack.c.b16 %v1437, %v1433
    %v1654 = vpack.c.b16 %v1438, %v1434
    %v1655 = vpack.c.b16 %v1443, %v1439
    %v1656 = vpack.c.b16 %v1444, %v1440
    %v1657 = vpack.c.b16 %v1445, %v1441
    %v1658 = vpack.c.b16 %v1446, %v1442
    %v1659 = vpack.c.b16 %v1451, %v1447
    %v1660 = vpack.c.b16 %v1452, %v1448
    %v1661 = vpack.c.b16 %v1453, %v1449
    %v1662 = vpack.c.b16 %v1454, %v1450
    %v1663 = vpack.c.b16 %v1459, %v1455
    %v1664 = vpack.c.b16 %v1460, %v1456
    %v1665 = vpack.c.b16 %v1461, %v1457
    %v1666 = vpack.c.b16 %v1462, %v1458
    %v1667 = vpack.c.b16 %v1467, %v1463
    %v1668 = vpack.c.b16 %v1468, %v1464
    %v1669 = vpack.c.b16 %v1469, %v1465
    %v1670 = vpack.c.b16 %v1470, %v1466
    %v1671 = vpack.c.b16 %v1475, %v1471
    %v1672 = vpack.c.b16 %v1476, %v1472
    %v1673 = vpack.c.b16 %v1477, %v1473
    %v1674 = vpack.c.b16 %v1478, %v1474
    %v1675 = vpack.c.b16 %v1483, %v1479
    %v1676 = vpack.c.b16 %v1484, %v1480
    %v1677 = vpack.c.b16 %v1485, %v1481
    %v1678 = vpack.c.b16 %v1486, %v1482
    %v1679 = vpack.c.b16 %v1491, %v1487
    %v1680 = vpack.c.b16 %v1492, %v1488
    %v1681 = vpack.c.b16 %v1493, %v1489
    %v1682 = vpack.c.b16 %v1494, %v1490
    %v1683 = vpack.c.b16 %v1499, %v1495
    %v1684 = vpack.c.b16 %v1500, %v1496
    %v1685 = vpack.c.b16 %v1501, %v1497
    %v1686 = vpack.c.b16 %v1502, %v1498
    %v1687 = vpack.c.b16 %v1507, %v1503
    %v1688 = vpack.c.b16 %v1508, %v1504
    %v1689 = vpack.c.b16 %v1509, %v1505
    %v1690 = vpack.c.b16 %v1510, %v1506
    %v1691 = vpack.c.b16 %v1515, %v1511
    %v1692 = vpack.c.b16 %v1516, %v1512
    %v1693 = vpack.c.b16 %v1517, %v1513
    %v1694 = vpack.c.b16 %v1518, %v1514
    %v1695 = vpack.c.b16 %v1523, %v1519
    %v1696 = vpack.c.b16 %v1524, %v1520
    %v1697 = vpack.c.b16 %v1525, %v1521
    %v1698 = vpack.c.b16 %v1526, %v1522
    %v1699 = vpack.c.b16 %v1531, %v1527
    %v1700 = vpack.c.b16 %v1532, %v1528
    %v1701 = vpack.c.b16 %v1533, %v1529
    %v1702 = vpack.c.b16 %v1534, %v1530
    %v1703 = vpack.c.b16 %v1539, %v1535
    %v1704 = vpack.c.b16 %v1540, %v1536
    %v1705 = vpack.c.b16 %v1541, %v1537
    %v1706 = vpack.c.b16 %v1542, %v1538
    %v1707 = vpack.c.b16 %v1547, %v1543
    %v1708 = vpack.c.b16 %v1548, %v1544
    %v1709 = vpack.c.b16 %v1549, %v1545
    %v1710 = vpack.c.b16 %v1550, %v1546
    %v1711 = vpack.c.b16 %v1555, %v1551
    %v1712 = vpack.c.b16 %v1556, %v1552
    %v1713 = vpack.c.b16 %v1557, %v1553
    %v1714 = vpack.c.b16 %v1558, %v1554
    %v1715 = vpack.c.b16 %v1563, %v1559
    %v1716 = vpack.c.b16 %v1564, %v1560
    %v1717 = vpack.c.b16 %v1565, %v1561
    %v1718 = vpack.c.b16 %v1566, %v1562
    %v1719 = vpack.c.b16 %v1571, %v1567
    %v1720 = vpack.c.b16 %v1572, %v1568
    %v1721 = vpack.c.b16 %v1573, %v1569
    %v1722 = vpack.c.b16 %v1574, %v1570
    %v1723 = vpack.c.b16 %v1579, %v1575
    %v1724 = vpack.c.b16 %v1580, %v1576
    %v1725 = vpack.c.b16 %v1581, %v1577
    %v1726 = vpack.c.b16 %v1582, %v1578
    %v1727 = vpack.c.b16 %v1587, %v1583
    %v1728 = vpack.c.b16 %v1588, %v1584
    %v1729 = vpack.c.b16 %v1589, %v1585
    %v1730 = vpack.c.b16 %v1590, %v1586
    %v1731 = vpack.c.b16 %v1595, %v1591
    %v1732 = vpack.c.b16 %v1596, %v1592
    %v1733 = vpack.c.b16 %v1597, %v1593
    %v1734 = vpack.c.b16 %v1598, %v1594
    %v1735 = vpack.c.b16 %v1603, %v1599
    %v1736 = vpack.c.b16 %v1604, %v1600
    %v1737 = vpack.c.b16 %v1605, %v1601
    %v1738 = vpack.c.b16 %v1606, %v1602
    %v1739 = vpack.c.b16 %v1611, %v1607
    %v1740 = vpack.c.b16 %v1612, %v1608
    %v1741 = vpack.c.b16 %v1613, %v1609
    %v1742 = vpack.c.b16 %v1614, %v1610
    %1871 = vmatprep.subr.bf16.mxu0 %v1616
    %1872 = vmatpush1.bf16.msra.mxu0 %v1615
    %1873 = vmatprep.subr.bf16.mxu0 %v1620
    %1874 = vmatpush1.bf16.msra.mxu0 %v1619
    %1875 = vmatprep.subr.bf16.mxu0 %v1624
    %1876 = vmatpush1.bf16.msra.mxu0 %v1623
    %1877 = vmatprep.subr.bf16.mxu0 %v1628
    %1878 = vmatpush1.bf16.msra.mxu0 %v1627
    %1879 = vmatprep.subr.bf16.mxu0 %v1632
    %1880 = vmatpush1.bf16.msra.mxu0 %v1631
    %1881 = vmatprep.subr.bf16.mxu0 %v1636
    %1882 = vmatpush1.bf16.msra.mxu0 %v1635
    %1883 = vmatprep.subr.bf16.mxu0 %v1640
    %1884 = vmatpush1.bf16.msra.mxu0 %v1639
    %1885 = vmatprep.subr.bf16.mxu0 %v1644
    %1886 = vmatpush1.bf16.msra.mxu0 %v1643
    %1887 = vmatprep.subr.bf16.mxu0 %v1648
    %1888 = vmatpush1.bf16.msra.mxu0 %v1647
    %1889 = vmatprep.subr.bf16.mxu0 %v1652
    %1890 = vmatpush1.bf16.msra.mxu0 %v1651
    %1891 = vmatprep.subr.bf16.mxu0 %v1656
    %1892 = vmatpush1.bf16.msra.mxu0 %v1655
    %1893 = vmatprep.subr.bf16.mxu0 %v1660
    %1894 = vmatpush1.bf16.msra.mxu0 %v1659
    %1895 = vmatprep.subr.bf16.mxu0 %v1664
    %1896 = vmatpush1.bf16.msra.mxu0 %v1663
    %1897 = vmatprep.subr.bf16.mxu0 %v1668
    %1898 = vmatpush1.bf16.msra.mxu0 %v1667
    %1899 = vmatprep.subr.bf16.mxu0 %v1672
    %1900 = vmatpush1.bf16.msra.mxu0 %v1671
    %1901 = vmatprep.subr.bf16.mxu0 %v1676
    %1902 = vmatpush1.bf16.msra.mxu0 %v1675
    %1903 = vmatprep.mubr.bf16.mxu0 %v1078
    %1904 = vmatmul.mubr.bf16.gmra.mrb[0].mxu0 %v1077
    %v1905 = vpop.f32.mrb[0].mxu0
    %v1906 = vadd.f32 %v1214, %v1905
    %v1907 = vpop.f32.mrb[0].mxu0
    %v1908 = vadd.f32 %v1218, %v1907
    %v1909 = vpop.f32.mrb[0].mxu0
    %v1910 = vadd.f32 %v1214, %v1909
    %v1911 = vpop.f32.mrb[0].mxu0
    %v1912 = vadd.f32 %v1218, %v1911
    %1913 = vdwg.mxu0
    %1914 = vmatprep.subr.bf16.mxu0 %v1680
    %1915 = vmatpush1.bf16.msra.mxu0 %v1679
    %1916 = vmatprep.subr.bf16.mxu0 %v1684
    %1917 = vmatpush1.bf16.msra.mxu0 %v1683
    %1918 = vmatprep.subr.bf16.mxu0 %v1688
    %1919 = vmatpush1.bf16.msra.mxu0 %v1687
    %1920 = vmatprep.subr.bf16.mxu0 %v1692
    %1921 = vmatpush1.bf16.msra.mxu0 %v1691
    %1922 = vmatprep.subr.bf16.mxu0 %v1696
    %1923 = vmatpush1.bf16.msra.mxu0 %v1695
    %1924 = vmatprep.subr.bf16.mxu0 %v1700
    %1925 = vmatpush1.bf16.msra.mxu0 %v1699
    %1926 = vmatprep.subr.bf16.mxu0 %v1704
    %1927 = vmatpush1.bf16.msra.mxu0 %v1703
    %1928 = vmatprep.subr.bf16.mxu0 %v1708
    %1929 = vmatpush1.bf16.msra.mxu0 %v1707
    %1930 = vmatprep.subr.bf16.mxu0 %v1712
    %1931 = vmatpush1.bf16.msra.mxu0 %v1711
    %1932 = vmatprep.subr.bf16.mxu0 %v1716
    %1933 = vmatpush1.bf16.msra.mxu0 %v1715
    %1934 = vmatprep.subr.bf16.mxu0 %v1720
    %1935 = vmatpush1.bf16.msra.mxu0 %v1719
    %1936 = vmatprep.subr.bf16.mxu0 %v1724
    %1937 = vmatpush1.bf16.msra.mxu0 %v1723
    %1938 = vmatprep.subr.bf16.mxu0 %v1728
    %1939 = vmatpush1.bf16.msra.mxu0 %v1727
    %1940 = vmatprep.subr.bf16.mxu0 %v1732
    %1941 = vmatpush1.bf16.msra.mxu0 %v1731
    %1942 = vmatprep.subr.bf16.mxu0 %v1736
    %1943 = vmatpush1.bf16.msra.mxu0 %v1735
    %1944 = vmatprep.subr.bf16.mxu0 %v1740
    %1945 = vmatpush1.bf16.msra.mxu0 %v1739
    %1946 = vmatprep.mubr.bf16.mxu0 %v1080
    %1947 = vmatmul.mubr.bf16.gmra.mrb[0].mxu0 %v1079
    %v1948 = vpop.f32.mrb[0].mxu0
    %v1949 = vadd.f32 %v1906, %v1948
    %v1950 = vpop.f32.mrb[0].mxu0
    %v1951 = vadd.f32 %v1908, %v1950
    %v1952 = vpop.f32.mrb[0].mxu0
    %v1953 = vadd.f32 %v1910, %v1952
    %v1954 = vpop.f32.mrb[0].mxu0
    %v1955 = vadd.f32 %v1912, %v1954
    %1956 = vdwg.mxu0
    %1957 = vmatprep.subr.bf16.mxu0 %v1618
    %1958 = vmatpush1.bf16.msra.mxu0 %v1617
    %1959 = vmatprep.subr.bf16.mxu0 %v1622
    %1960 = vmatpush1.bf16.msra.mxu0 %v1621
    %1961 = vmatprep.subr.bf16.mxu0 %v1626
    %1962 = vmatpush1.bf16.msra.mxu0 %v1625
    %1963 = vmatprep.subr.bf16.mxu0 %v1630
    %1964 = vmatpush1.bf16.msra.mxu0 %v1629
    %1965 = vmatprep.subr.bf16.mxu0 %v1634
    %1966 = vmatpush1.bf16.msra.mxu0 %v1633
    %1967 = vmatprep.subr.bf16.mxu0 %v1638
    %1968 = vmatpush1.bf16.msra.mxu0 %v1637
    %1969 = vmatprep.subr.bf16.mxu0 %v1642
    %1970 = vmatpush1.bf16.msra.mxu0 %v1641
    %1971 = vmatprep.subr.bf16.mxu0 %v1646
    %1972 = vmatpush1.bf16.msra.mxu0 %v1645
    %1973 = vmatprep.subr.bf16.mxu0 %v1650
    %1974 = vmatpush1.bf16.msra.mxu0 %v1649
    %1975 = vmatprep.subr.bf16.mxu0 %v1654
    %1976 = vmatpush1.bf16.msra.mxu0 %v1653
    %1977 = vmatprep.subr.bf16.mxu0 %v1658
    %1978 = vmatpush1.bf16.msra.mxu0 %v1657
    %1979 = vmatprep.subr.bf16.mxu0 %v1662
    %1980 = vmatpush1.bf16.msra.mxu0 %v1661
    %1981 = vmatprep.subr.bf16.mxu0 %v1666
    %1982 = vmatpush1.bf16.msra.mxu0 %v1665
    %1983 = vmatprep.subr.bf16.mxu0 %v1670
    %1984 = vmatpush1.bf16.msra.mxu0 %v1669
    %1985 = vmatprep.subr.bf16.mxu0 %v1674
    %1986 = vmatpush1.bf16.msra.mxu0 %v1673
    %1987 = vmatprep.subr.bf16.mxu0 %v1678
    %1988 = vmatpush1.bf16.msra.mxu0 %v1677
    %1989 = vmatprep.mubr.bf16.mxu0 %v1078
    %1990 = vmatmul.mubr.bf16.gmra.mrb[0].mxu0 %v1077
    %v1991 = vpop.f32.mrb[0].mxu0
    %v1992 = vadd.f32 %v1222, %v1991
    %v1993 = vpop.f32.mrb[0].mxu0
    %v1994 = vadd.f32 %v1226, %v1993
    %v1995 = vpop.f32.mrb[0].mxu0
    %v1996 = vadd.f32 %v1222, %v1995
    %v1997 = vpop.f32.mrb[0].mxu0
    %v1998 = vadd.f32 %v1226, %v1997
    %1999 = vdwg.mxu0
    %2000 = vmatprep.subr.bf16.mxu0 %v1682
    %2001 = vmatpush1.bf16.msra.mxu0 %v1681
    %2002 = vmatprep.subr.bf16.mxu0 %v1686
    %2003 = vmatpush1.bf16.msra.mxu0 %v1685
    %2004 = vmatprep.subr.bf16.mxu0 %v1690
    %2005 = vmatpush1.bf16.msra.mxu0 %v1689
    %2006 = vmatprep.subr.bf16.mxu0 %v1694
    %2007 = vmatpush1.bf16.msra.mxu0 %v1693
    %2008 = vmatprep.subr.bf16.mxu0 %v1698
    %2009 = vmatpush1.bf16.msra.mxu0 %v1697
    %2010 = vmatprep.subr.bf16.mxu0 %v1702
    %2011 = vmatpush1.bf16.msra.mxu0 %v1701
    %2012 = vmatprep.subr.bf16.mxu0 %v1706
    %2013 = vmatpush1.bf16.msra.mxu0 %v1705
    %2014 = vmatprep.subr.bf16.mxu0 %v1710
    %2015 = vmatpush1.bf16.msra.mxu0 %v1709
    %2016 = vmatprep.subr.bf16.mxu0 %v1714
    %2017 = vmatpush1.bf16.msra.mxu0 %v1713
    %2018 = vmatprep.subr.bf16.mxu0 %v1718
    %2019 = vmatpush1.bf16.msra.mxu0 %v1717
    %2020 = vmatprep.subr.bf16.mxu0 %v1722
    %2021 = vmatpush1.bf16.msra.mxu0 %v1721
    %2022 = vmatprep.subr.bf16.mxu0 %v1726
    %2023 = vmatpush1.bf16.msra.mxu0 %v1725
    %2024 = vmatprep.subr.bf16.mxu0 %v1730
    %2025 = vmatpush1.bf16.msra.mxu0 %v1729
    %2026 = vmatprep.subr.bf16.mxu0 %v1734
    %2027 = vmatpush1.bf16.msra.mxu0 %v1733
    %2028 = vmatprep.subr.bf16.mxu0 %v1738
    %2029 = vmatpush1.bf16.msra.mxu0 %v1737
    %2030 = vmatprep.subr.bf16.mxu0 %v1742
    %2031 = vmatpush1.bf16.msra.mxu0 %v1741
    %2032 = vmatprep.mubr.bf16.mxu0 %v1080
    %2033 = vmatmul.mubr.bf16.gmra.mrb[0].mxu0 %v1079
    %v2034 = vpop.f32.mrb[0].mxu0
    %v2035 = vadd.f32 %v1992, %v2034
    %v2036 = vpop.f32.mrb[0].mxu0
    %v2037 = vadd.f32 %v1994, %v2036
    %v2038 = vpop.f32.mrb[0].mxu0
    %v2039 = vadd.f32 %v1996, %v2038
    %v2040 = vpop.f32.mrb[0].mxu0
    %v2041 = vadd.f32 %v1998, %v2040
    %2042 = vdwg.mxu0
    %v2043 = vmax.f32 %v1949, 0.0
    %v2044 = vmax.f32 %v1951, 0.0
    %v2045 = vmax.f32 %v2035, 0.0
    %v2046 = vmax.f32 %v2037, 0.0
    %v2047 = vmax.f32 %v1953, 0.0
    %v2048 = vmax.f32 %v1955, 0.0
    %v2049 = vmax.f32 %v2039, 0.0
    %v2050 = vmax.f32 %v2041, 0.0
    %v2051 = vpack.c.bf16 %v2047, %v2043
    %v2052 = vpack.c.bf16 %v2048, %v2044
    %v2053 = vpack.c.bf16 %v2049, %v2045
    %v2054 = vpack.c.bf16 %v2050, %v2046
    %v2055 = vld [vmem:[#allocation8] sm:$0xf]
    %v2056 = vld [vmem:[#allocation8 + $0x4] sm:$0xf]
    %v2057 = vld [vmem:[#allocation8 + $0x8] sm:$0xf]
    %v2058 = vld [vmem:[#allocation8 + $0xc] sm:$0xf]
    %v2059 = vld [vmem:[#allocation8 + $0x10] sm:$0xf]
    %v2060 = vld [vmem:[#allocation8 + $0x14] sm:$0xf]
    %v2061 = vld [vmem:[#allocation8 + $0x18] sm:$0xf]
    %v2062 = vld [vmem:[#allocation8 + $0x1c] sm:$0xf]
    %v2063 = vld [vmem:[#allocation8 + $0x20] sm:$0xf]
    %v2064 = vld [vmem:[#allocation8 + $0x24] sm:$0xf]
    %v2065 = vld [vmem:[#allocation8 + $0x28] sm:$0xf]
    %v2066 = vld [vmem:[#allocation8 + $0x2c] sm:$0xf]
    %v2067 = vld [vmem:[#allocation8 + $0x30] sm:$0xf]
    %v2068 = vld [vmem:[#allocation8 + $0x34] sm:$0xf]
    %v2069 = vld [vmem:[#allocation8 + $0x38] sm:$0xf]
    %v2070 = vld [vmem:[#allocation8 + $0x3c] sm:$0xf]
    %v2071 = vld [vmem:[#allocation8 + $0x40] sm:$0xf]
    %v2072 = vld [vmem:[#allocation8 + $0x44] sm:$0xf]
    %v2073 = vld [vmem:[#allocation8 + $0x48] sm:$0xf]
    %v2074 = vld [vmem:[#allocation8 + $0x4c] sm:$0xf]
    %v2075 = vld [vmem:[#allocation8 + $0x50] sm:$0xf]
    %v2076 = vld [vmem:[#allocation8 + $0x54] sm:$0xf]
    %v2077 = vld [vmem:[#allocation8 + $0x58] sm:$0xf]
    %v2078 = vld [vmem:[#allocation8 + $0x5c] sm:$0xf]
    %v2079 = vld [vmem:[#allocation8 + $0x60] sm:$0xf]
    %v2080 = vld [vmem:[#allocation8 + $0x64] sm:$0xf]
    %v2081 = vld [vmem:[#allocation8 + $0x68] sm:$0xf]
    %v2082 = vld [vmem:[#allocation8 + $0x6c] sm:$0xf]
    %v2083 = vld [vmem:[#allocation8 + $0x70] sm:$0xf]
    %v2084 = vld [vmem:[#allocation8 + $0x74] sm:$0xf]
    %v2085 = vld [vmem:[#allocation8 + $0x78] sm:$0xf]
    %v2086 = vld [vmem:[#allocation8 + $0x7c] sm:$0xf]
    %v2087 = vld [vmem:[#allocation8 + $0x80] sm:$0xf]
    %v2088 = vld [vmem:[#allocation8 + $0x84] sm:$0xf]
    %v2089 = vld [vmem:[#allocation8 + $0x88] sm:$0xf]
    %v2090 = vld [vmem:[#allocation8 + $0x8c] sm:$0xf]
    %v2091 = vld [vmem:[#allocation8 + $0x90] sm:$0xf]
    %v2092 = vld [vmem:[#allocation8 + $0x94] sm:$0xf]
    %v2093 = vld [vmem:[#allocation8 + $0x98] sm:$0xf]
    %v2094 = vld [vmem:[#allocation8 + $0x9c] sm:$0xf]
    %v2095 = vld [vmem:[#allocation8 + $0xa0] sm:$0xf]
    %v2096 = vld [vmem:[#allocation8 + $0xa4] sm:$0xf]
    %v2097 = vld [vmem:[#allocation8 + $0xa8] sm:$0xf]
    %v2098 = vld [vmem:[#allocation8 + $0xac] sm:$0xf]
    %v2099 = vld [vmem:[#allocation8 + $0xb0] sm:$0xf]
    %v2100 = vld [vmem:[#allocation8 + $0xb4] sm:$0xf]
    %v2101 = vld [vmem:[#allocation8 + $0xb8] sm:$0xf]
    %v2102 = vld [vmem:[#allocation8 + $0xbc] sm:$0xf]
    %v2103 = vld [vmem:[#allocation8 + $0xc0] sm:$0xf]
    %v2104 = vld [vmem:[#allocation8 + $0xc4] sm:$0xf]
    %v2105 = vld [vmem:[#allocation8 + $0xc8] sm:$0xf]
    %v2106 = vld [vmem:[#allocation8 + $0xcc] sm:$0xf]
    %v2107 = vld [vmem:[#allocation8 + $0xd0] sm:$0xf]
    %v2108 = vld [vmem:[#allocation8 + $0xd4] sm:$0xf]
    %v2109 = vld [vmem:[#allocation8 + $0xd8] sm:$0xf]
    %v2110 = vld [vmem:[#allocation8 + $0xdc] sm:$0xf]
    %v2111 = vld [vmem:[#allocation8 + $0xe0] sm:$0xf]
    %v2112 = vld [vmem:[#allocation8 + $0xe4] sm:$0xf]
    %v2113 = vld [vmem:[#allocation8 + $0xe8] sm:$0xf]
    %v2114 = vld [vmem:[#allocation8 + $0xec] sm:$0xf]
    %v2115 = vld [vmem:[#allocation8 + $0xf0] sm:$0xf]
    %v2116 = vld [vmem:[#allocation8 + $0xf4] sm:$0xf]
    %v2117 = vld [vmem:[#allocation8 + $0xf8] sm:$0xf]
    %v2118 = vld [vmem:[#allocation8 + $0xfc] sm:$0xf]
    %v2119 = vld [vmem:[%s6] sm:$0x1]
    %v2121 = vlaneseq
    %v2122 = vshrl.u32 %v2121, 7
    %v2123 = vsub.s32 0, %v2122
    %v2124 = vrot.slane %v2119, %v2123
    %v2190 = vunpack.c.l.b16 %v2055
    %v2191 = vunpack.c.l.b16 %v2056
    %v2192 = vunpack.c.l.b16 %v2057
    %v2193 = vunpack.c.l.b16 %v2058
    %v2194 = vunpack.c.l.b16 %v2059
    %v2195 = vunpack.c.l.b16 %v2060
    %v2196 = vunpack.c.l.b16 %v2061
    %v2197 = vunpack.c.l.b16 %v2062
    %v2198 = vunpack.c.l.b16 %v2063
    %v2199 = vunpack.c.l.b16 %v2064
    %v2200 = vunpack.c.l.b16 %v2065
    %v2201 = vunpack.c.l.b16 %v2066
    %v2202 = vunpack.c.l.b16 %v2067
    %v2203 = vunpack.c.l.b16 %v2068
    %v2204 = vunpack.c.l.b16 %v2069
    %v2205 = vunpack.c.l.b16 %v2070
    %v2206 = vunpack.c.l.b16 %v2071
    %v2207 = vunpack.c.l.b16 %v2072
    %v2208 = vunpack.c.l.b16 %v2073
    %v2209 = vunpack.c.l.b16 %v2074
    %v2210 = vunpack.c.l.b16 %v2075
    %v2211 = vunpack.c.l.b16 %v2076
    %v2212 = vunpack.c.l.b16 %v2077
    %v2213 = vunpack.c.l.b16 %v2078
    %v2214 = vunpack.c.l.b16 %v2079
    %v2215 = vunpack.c.l.b16 %v2080
    %v2216 = vunpack.c.l.b16 %v2081
    %v2217 = vunpack.c.l.b16 %v2082
    %v2218 = vunpack.c.l.b16 %v2083
    %v2219 = vunpack.c.l.b16 %v2084
    %v2220 = vunpack.c.l.b16 %v2085
    %v2221 = vunpack.c.l.b16 %v2086
    %v2222 = vunpack.c.l.b16 %v2087
    %v2223 = vunpack.c.l.b16 %v2088
    %v2224 = vunpack.c.l.b16 %v2089
    %v2225 = vunpack.c.l.b16 %v2090
    %v2226 = vunpack.c.l.b16 %v2091
    %v2227 = vunpack.c.l.b16 %v2092
    %v2228 = vunpack.c.l.b16 %v2093
    %v2229 = vunpack.c.l.b16 %v2094
    %v2230 = vunpack.c.l.b16 %v2095
    %v2231 = vunpack.c.l.b16 %v2096
    %v2232 = vunpack.c.l.b16 %v2097
    %v2233 = vunpack.c.l.b16 %v2098
    %v2234 = vunpack.c.l.b16 %v2099
    %v2235 = vunpack.c.l.b16 %v2100
    %v2236 = vunpack.c.l.b16 %v2101
    %v2237 = vunpack.c.l.b16 %v2102
    %v2238 = vunpack.c.l.b16 %v2103
    %v2239 = vunpack.c.l.b16 %v2104
    %v2240 = vunpack.c.l.b16 %v2105
    %v2241 = vunpack.c.l.b16 %v2106
    %v2242 = vunpack.c.l.b16 %v2107
    %v2243 = vunpack.c.l.b16 %v2108
    %v2244 = vunpack.c.l.b16 %v2109
    %v2245 = vunpack.c.l.b16 %v2110
    %v2246 = vunpack.c.l.b16 %v2111
    %v2247 = vunpack.c.l.b16 %v2112
    %v2248 = vunpack.c.l.b16 %v2113
    %v2249 = vunpack.c.l.b16 %v2114
    %v2250 = vunpack.c.l.b16 %v2115
    %v2251 = vunpack.c.l.b16 %v2116
    %v2252 = vunpack.c.l.b16 %v2117
    %v2253 = vunpack.c.l.b16 %v2118
    %v2254 = vpack.c.b16 %v2191, %v2190
    %v2255 = vpack.c.b16 %v2193, %v2192
    %v2256 = vpack.c.b16 %v2195, %v2194
    %v2257 = vpack.c.b16 %v2197, %v2196
    %v2258 = vpack.c.b16 %v2199, %v2198
    %v2259 = vpack.c.b16 %v2201, %v2200
    %v2260 = vpack.c.b16 %v2203, %v2202
    %v2261 = vpack.c.b16 %v2205, %v2204
    %v2262 = vpack.c.b16 %v2207, %v2206
    %v2263 = vpack.c.b16 %v2209, %v2208
    %v2264 = vpack.c.b16 %v2211, %v2210
    %v2265 = vpack.c.b16 %v2213, %v2212
    %v2266 = vpack.c.b16 %v2215, %v2214
    %v2267 = vpack.c.b16 %v2217, %v2216
    %v2268 = vpack.c.b16 %v2219, %v2218
    %v2269 = vpack.c.b16 %v2221, %v2220
    %v2270 = vpack.c.b16 %v2223, %v2222
    %v2271 = vpack.c.b16 %v2225, %v2224
    %v2272 = vpack.c.b16 %v2227, %v2226
    %v2273 = vpack.c.b16 %v2229, %v2228
    %v2274 = vpack.c.b16 %v2231, %v2230
    %v2275 = vpack.c.b16 %v2233, %v2232
    %v2276 = vpack.c.b16 %v2235, %v2234
    %v2277 = vpack.c.b16 %v2237, %v2236
    %v2278 = vpack.c.b16 %v2239, %v2238
    %v2279 = vpack.c.b16 %v2241, %v2240
    %v2280 = vpack.c.b16 %v2243, %v2242
    %v2281 = vpack.c.b16 %v2245, %v2244
    %v2282 = vpack.c.b16 %v2247, %v2246
    %v2283 = vpack.c.b16 %v2249, %v2248
    %v2284 = vpack.c.b16 %v2251, %v2250
    %v2285 = vpack.c.b16 %v2253, %v2252
    %2318 = vmatprep.subr.bf16.mxu0 0
    %2319 = vmatpush1.bf16.msra.mxu0 %v2254
    %2320 = vmatprep.subr.bf16.mxu0 0
    %2321 = vmatpush1.bf16.msra.mxu0 %v2255
    %2322 = vmatprep.subr.bf16.mxu0 0
    %2323 = vmatpush1.bf16.msra.mxu0 %v2256
    %2324 = vmatprep.subr.bf16.mxu0 0
    %2325 = vmatpush1.bf16.msra.mxu0 %v2257
    %2326 = vmatprep.subr.bf16.mxu0 0
    %2327 = vmatpush1.bf16.msra.mxu0 %v2258
    %2328 = vmatprep.subr.bf16.mxu0 0
    %2329 = vmatpush1.bf16.msra.mxu0 %v2259
    %2330 = vmatprep.subr.bf16.mxu0 0
    %2331 = vmatpush1.bf16.msra.mxu0 %v2260
    %2332 = vmatprep.subr.bf16.mxu0 0
    %2333 = vmatpush1.bf16.msra.mxu0 %v2261
    %2334 = vmatprep.subr.bf16.mxu0 0
    %2335 = vmatpush1.bf16.msra.mxu0 %v2262
    %2336 = vmatprep.subr.bf16.mxu0 0
    %2337 = vmatpush1.bf16.msra.mxu0 %v2263
    %2338 = vmatprep.subr.bf16.mxu0 0
    %2339 = vmatpush1.bf16.msra.mxu0 %v2264
    %2340 = vmatprep.subr.bf16.mxu0 0
    %2341 = vmatpush1.bf16.msra.mxu0 %v2265
    %2342 = vmatprep.subr.bf16.mxu0 0
    %2343 = vmatpush1.bf16.msra.mxu0 %v2266
    %2344 = vmatprep.subr.bf16.mxu0 0
    %2345 = vmatpush1.bf16.msra.mxu0 %v2267
    %2346 = vmatprep.subr.bf16.mxu0 0
    %2347 = vmatpush1.bf16.msra.mxu0 %v2268
    %2348 = vmatprep.subr.bf16.mxu0 0
    %2349 = vmatpush1.bf16.msra.mxu0 %v2269
    %2350 = vmatprep.mubr.bf16.mxu0 %v2052
    %2351 = vmatmul.mubr.bf16.gmra.mrb[0].mxu0 %v2051
    %v2352 = vpop.f32.mrb[0].mxu0
    %v2353 = vadd.f32 %v2124, %v2352
    %v2354 = vpop.f32.mrb[0].mxu0
    %v2355 = vpop.f32.mrb[0].mxu0
    %v2356 = vadd.f32 %v2124, %v2355
    %v2357 = vpop.f32.mrb[0].mxu0
    %2358 = vdwg.mxu0
    %2359 = vmatprep.subr.bf16.mxu0 0
    %2360 = vmatpush1.bf16.msra.mxu0 %v2270
    %2361 = vmatprep.subr.bf16.mxu0 0
    %2362 = vmatpush1.bf16.msra.mxu0 %v2271
    %2363 = vmatprep.subr.bf16.mxu0 0
    %2364 = vmatpush1.bf16.msra.mxu0 %v2272
    %2365 = vmatprep.subr.bf16.mxu0 0
    %2366 = vmatpush1.bf16.msra.mxu0 %v2273
    %2367 = vmatprep.subr.bf16.mxu0 0
    %2368 = vmatpush1.bf16.msra.mxu0 %v2274
    %2369 = vmatprep.subr.bf16.mxu0 0
    %2370 = vmatpush1.bf16.msra.mxu0 %v2275
    %2371 = vmatprep.subr.bf16.mxu0 0
    %2372 = vmatpush1.bf16.msra.mxu0 %v2276
    %2373 = vmatprep.subr.bf16.mxu0 0
    %2374 = vmatpush1.bf16.msra.mxu0 %v2277
    %2375 = vmatprep.subr.bf16.mxu0 0
    %2376 = vmatpush1.bf16.msra.mxu0 %v2278
    %2377 = vmatprep.subr.bf16.mxu0 0
    %2378 = vmatpush1.bf16.msra.mxu0 %v2279
    %2379 = vmatprep.subr.bf16.mxu0 0
    %2380 = vmatpush1.bf16.msra.mxu0 %v2280
    %2381 = vmatprep.subr.bf16.mxu0 0
    %2382 = vmatpush1.bf16.msra.mxu0 %v2281
    %2383 = vmatprep.subr.bf16.mxu0 0
    %2384 = vmatpush1.bf16.msra.mxu0 %v2282
    %2385 = vmatprep.subr.bf16.mxu0 0
    %2386 = vmatpush1.bf16.msra.mxu0 %v2283
    %2387 = vmatprep.subr.bf16.mxu0 0
    %2388 = vmatpush1.bf16.msra.mxu0 %v2284
    %2389 = vmatprep.subr.bf16.mxu0 0
    %2390 = vmatpush1.bf16.msra.mxu0 %v2285
    %2391 = vmatprep.mubr.bf16.mxu0 %v2054
    %2392 = vmatmul.mubr.bf16.gmra.mrb[0].mxu0 %v2053
    %v2393 = vpop.f32.mrb[0].mxu0
    %v2394 = vadd.f32 %v2353, %v2393
    %v2395 = vpop.f32.mrb[0].mxu0
    %v2396 = vpop.f32.mrb[0].mxu0
    %v2397 = vadd.f32 %v2356, %v2396
    %v2398 = vpop.f32.mrb[0].mxu0
    %2399 = vdwg.mxu0
    %2400 = vst [vmem:[#allocation10] sm:$0xff] %v2394
    %2401 = vst [vmem:[#allocation10 + $0x8] sm:$0xff] %v2397
    // Predicated region
    $region46: #{tpu_custom_call.1} parent=1 // pred_check
      _
    $region47: #{tpu_custom_call.1} parent=1 // pred_check_branch
      %2403 = sbr.rel (0) target = $region49
    $region48: #{tpu_custom_call.1} parent=1 // pred_region
      %s2405 = ssub.s32 256, 256
      %2406 = vsyncadd [#allocation4], %s2405
      %s2407 = sshll.u32 [#allocation10], 4
      %s2408 = int_to_ptr.vmem [resolvable:$true] %s2407
      %2413 = dma.vmem_to_hbm [thread:$0]  %s2408, 256, %s7, [#allocation4], 128, 128, 8
    $region49: #{tpu_custom_call.1} parent=1 // pred_fallthru
      _
    // Predicated region
    $region50: #{tpu_custom_call.1} parent=1 // pred_check
      _
    $region51: #{tpu_custom_call.1} parent=1 // pred_check_branch
      %2415 = sbr.rel (0) target = $region53
    $region52: #{tpu_custom_call.1} parent=1 // pred_region
      %2416 = dma.done [#allocation4], 256
    $region53: #{tpu_custom_call.1} parent=1 // pred_fallthru
      _
    %2417 = vsyncpa [#allocation3], 1
    %2418 = vsyncpa [#allocation6], 1
    %2419 = vsyncpa [#allocation9], 1
    %2420 = vsyncpa [#allocation4], 1

</llo_original>
